<compile_context>
chip_gen: v7x
topology: tpu7x:2x2x1
jax: 0.10.0
libtpu: 0.0.40
codegen_flags: <defaults>
</compile_context>

<pallas_src>
import functools

import jax
import jax.numpy as jnp
from jax.experimental import pallas as pl
from jax.experimental.pallas import tpu as pltpu


# ------------------------------ fused kernel --------------------------------
def _seq2seq_kernel(x_ref, wih_ref, b_ref, enc_whh_ref, dec_whh_ref,
                    out_w_ref, out_b_ref,
                    out_ref,
                    xp_ref,
                    *, seq_len, bpad):
    """Fused encoder+decoder RNN forward; all operands VMEM-resident.

    Shapes (TBp = seq_len * bpad, bpad = 8 = one sublane tile):
      x_ref        (TBp, D)   flattened, batch-padded, seq-first input
      wih_ref      (D, 2H)    [W_ih^enc | W_ih^dec] pre-transposed, lane-concatenated
      b_ref        (1, 2H)    [b_enc | b_dec], each b_ih + b_hh folded
      *_whh_ref    (H, H)     hidden->hidden weights (pre-transposed)
      out_w_ref    (1, H)     Linear(H, 1) weight as a row (VMEM)
      out_b_ref    (1,)       Linear bias (SMEM scalar)
      out_ref      (TBp, 1)   per-step head outputs
      xp_ref       (TBp, 2H)  fused hoisted projections; dec lanes are overwritten
                              in place with the decoder hidden states
    """
    f32 = jnp.float32
    hidden = enc_whh_ref.shape[0]

    x = x_ref[...]                                  # (TBp, D)
    enc_whh = enc_whh_ref[...]                      # (H, H), hoisted out of the loop
    dec_whh = dec_whh_ref[...]                      # (H, H)

    # ---- fused hoisted input projection: ONE matmul for both RNNs ----
    xp_ref[...] = (jnp.dot(x, wih_ref[...], preferred_element_type=f32)
                   + b_ref[...])

    # ---- encoder recurrence: h_t = tanh(xp_enc[t] + h_{t-1} @ W_hh) ----
    # Row slabs [t*bpad, t*bpad+8) are sublane-aligned; the xp load does not sit on
    # the serial h-chain, so its lane sub-slice is hidden under the MXU/EUP latency.
    def enc_step(t, h):
        row = pl.multiple_of(t * bpad, bpad)
        x_t = xp_ref[pl.ds(row, bpad), pl.ds(0, hidden)]        # (Bp, H) enc lanes
        return jnp.tanh(x_t + jnp.dot(h, enc_whh, preferred_element_type=f32))

    h0 = jnp.zeros((bpad, hidden), f32)
    h_n = jax.lax.fori_loop(0, seq_len, enc_step, h0, unroll=True)

    # ---- decoder recurrence (init h_n); h_t overwrites xp_dec[t] in place ----
    def dec_step(t, h):
        row = pl.multiple_of(t * bpad, bpad)
        x_t = xp_ref[pl.ds(row, bpad), pl.ds(hidden, hidden)]   # (Bp, H) dec lanes
        h_new = jnp.tanh(x_t + jnp.dot(h, dec_whh, preferred_element_type=f32))
        xp_ref[pl.ds(row, bpad), pl.ds(hidden, hidden)] = h_new  # dead slot reuse
        return h_new

    jax.lax.fori_loop(0, seq_len, dec_step, h_n, unroll=True)

    # ---- batched Linear(H, 1) head: one multiply + lane reduce + ONE store ----
    # (out last-dim of 1 is fine at TBp=64; make it lane-dense only if TB grows.)
    h_dec = xp_ref[...][:, hidden:]                              # (TBp, H)
    out_ref[...] = (jnp.sum(h_dec * out_w_ref[...], axis=-1, keepdims=True)
                    + out_b_ref[0])


# -------------------------------- wrapper ------------------------------------
def seq2seq_forward(x, target, batch_size, params):
    """Mirrors Seq2seq.forward: r_out, h_n = encoder(x); out = decoder(x, h_n)."""
    del target, batch_size  # only used for the discarded zeros init in torch
    T, B, D = x.shape
    H = params["enc_whh_t"].shape[0]
    BP = 8  # pad batch to one sublane tile -> aligned per-step slabs in the kernel

    # Wrapper-side layout plumbing only (no compute hoisted out of the kernel):
    x_pad = jnp.zeros((T, BP, D), jnp.float32).at[:, :B, :].set(x)
    x2d = x_pad.reshape(T * BP, D)
    wih_cat = jnp.concatenate([params["enc_wih_t"], params["dec_wih_t"]], axis=1)  # (D, 2H)
    b_cat = jnp.concatenate([params["enc_b"], params["dec_b"]], axis=1)            # (1, 2H)

    kernel = functools.partial(_seq2seq_kernel, seq_len=T, bpad=BP)
    vmem = pl.BlockSpec(memory_space=pltpu.MemorySpace.VMEM)
    smem = pl.BlockSpec(memory_space=pltpu.MemorySpace.SMEM)

    out2d = pl.pallas_call(
        kernel,
        out_shape=jax.ShapeDtypeStruct((T * BP, 1), jnp.float32),
        in_specs=[vmem, vmem, vmem, vmem, vmem, vmem, smem],
        out_specs=vmem,
        scratch_shapes=[pltpu.VMEM((T * BP, 2 * H), jnp.float32)],   # fused xp / dec h
        compiler_params=pltpu.CompilerParams(
            # Resident footprint is a few KB; explicit budget keeps this honest on
            # v7x (64 MiB physical / 32 MiB default scoped). If T*B*H grows, switch
            # to grid=(T//Tc,) with the hidden state as an 'arbitrary'-axis
            # accumulator so the resident scratch is O(Tc*B*H).
            vmem_limit_bytes=16 * 1024 * 1024),
    )(x2d, wih_cat, b_cat,
      params["enc_whh_t"], params["dec_whh_t"],
      params["out_w"], params["out_b"])

    return out2d.reshape(T, BP, 1)[:, :B, :]


# ------------------------------ reference -----------------------------------
def seq2seq_ref(x, params):
    def enc_step(h, x_t):
        h = jnp.tanh(x_t @ params["enc_wih_t"] + h @ params["enc_whh_t"]
                     + params["enc_b"])
        return h, None

    B = x.shape[1]
    H = params["enc_whh_t"].shape[0]
    h0 = jnp.zeros((B, H), jnp.float32)
    h_n, _ = jax.lax.scan(enc_step, h0, x)

    def dec_step(h, x_t):
        h = jnp.tanh(x_t @ params["dec_wih_t"] + h @ params["dec_whh_t"]
                     + params["dec_b"])
        y = h @ params["out_w"].T + params["out_b"]   # (B, 1)
        return h, y

    _, ys = jax.lax.scan(dec_step, h_n, x)
    return ys  # (T, B, 1)


# --------------------------------- main --------------------------------------
if __name__ == "__main__":
    T, B, D, H = 8, 2, 4, 32

    key = jax.random.PRNGKey(0)
    ks = jax.random.split(key, 10)
    s = 1.0 / jnp.sqrt(H)

    def u(k, shape):
        return jax.random.uniform(k, shape, jnp.float32, -s, s)

    params = {
        # encoder RNN (weights stored pre-transposed: (D,H) / (H,H))
        "enc_wih_t": u(ks[0], (D, H)),
        "enc_whh_t": u(ks[1], (H, H)),
        "enc_b":     u(ks[2], (1, H)),   # b_ih + b_hh folded
        # decoder RNN
        "dec_wih_t": u(ks[3], (D, H)),
        "dec_whh_t": u(ks[4], (H, H)),
        "dec_b":     u(ks[5], (1, H)),
        # decoder output head Linear(H, 1): weight as a (1, H) row, bias as (1,)
        "out_w":     u(ks[6], (1, H)),
        "out_b":     u(ks[7], (1,)),
    }

    x = jax.random.normal(ks[8], (T, B, D), jnp.float32)
    target = jax.random.normal(ks[9], (T, B, 1), jnp.float32)

    out = seq2seq_forward(x, target, B, params)
    out = jax.block_until_ready(out)

    ref = seq2seq_ref(x, params)
    assert out.shape == (T, B, 1)
    assert jnp.allclose(out, ref, rtol=1e-3, atol=1e-3)

    print("KERNEL_OK")
</pallas_src>

<mosaic_0001>
module attributes {stable_mosaic.version = 11 : i64} {
  func.func @_seq2seq_kernel(%arg0: memref<64x4xf32, #tpu.memory_space<vmem>>, %arg1: memref<4x64xf32, #tpu.memory_space<vmem>>, %arg2: memref<1x64xf32, #tpu.memory_space<vmem>>, %arg3: memref<32x32xf32, #tpu.memory_space<vmem>>, %arg4: memref<32x32xf32, #tpu.memory_space<vmem>>, %arg5: memref<1x32xf32, #tpu.memory_space<vmem>>, %arg6: memref<1xf32, #tpu.memory_space<smem>>, %arg7: memref<64x1xf32, #tpu.memory_space<vmem>>, %arg8: memref<64x64xf32, #tpu.memory_space<vmem>>) attributes {dimension_semantics = [], scalar_prefetch = 0 : i64, scratch_operands = 1 : i64, tpu.core_type = #tpu.core_type<tc>} {
    %c0 = arith.constant 0 : index
    %c0_0 = arith.constant 0 : index
    %0 = vector.load %arg0[%c0, %c0_0] : memref<64x4xf32, #tpu.memory_space<vmem>>, vector<64x4xf32>
    %c0_1 = arith.constant 0 : index
    %c0_2 = arith.constant 0 : index
    %1 = vector.load %arg3[%c0_1, %c0_2] : memref<32x32xf32, #tpu.memory_space<vmem>>, vector<32x32xf32>
    %c0_3 = arith.constant 0 : index
    %c0_4 = arith.constant 0 : index
    %2 = vector.load %arg4[%c0_3, %c0_4] : memref<32x32xf32, #tpu.memory_space<vmem>>, vector<32x32xf32>
    %c0_5 = arith.constant 0 : index
    %c0_6 = arith.constant 0 : index
    %3 = vector.load %arg1[%c0_5, %c0_6] : memref<4x64xf32, #tpu.memory_space<vmem>>, vector<4x64xf32>
    %cst = arith.constant dense<0.000000e+00> : vector<64x64xf32>
    %4 = tpu.matmul %0, %3, %cst {dimension_numbers = #tpu.dot_dimension_numbers<[1], [0], [0], [1], [0, 0, 1, 1], [], []>} : vector<64x4xf32>, vector<4x64xf32>, vector<64x64xf32> -> vector<64x64xf32>
    %c0_7 = arith.constant 0 : index
    %c0_8 = arith.constant 0 : index
    %5 = vector.load %arg2[%c0_7, %c0_8] : memref<1x64xf32, #tpu.memory_space<vmem>>, vector<1x64xf32>
    %6 = vector.broadcast %5 : vector<1x64xf32> to vector<64x64xf32>
    %7 = arith.addf %4, %6 : vector<64x64xf32>
    %c0_9 = arith.constant 0 : index
    %c0_10 = arith.constant 0 : index
    %8 = vector.load %arg8[%c0_9, %c0_10] : memref<64x64xf32, #tpu.memory_space<vmem>>, vector<64x64xf32>
    tpu.vector_store %arg8[%c0_9, %c0_10], %7 {strides = array<i32>} : memref<64x64xf32, #tpu.memory_space<vmem>>, vector<64x64xf32>,
    %cst_11 = arith.constant 0.000000e+00 : f32
    %9 = vector.broadcast %cst_11 : f32 to vector<8x32xf32>
    %c0_i32 = arith.constant 0 : i32
    %c8_i32 = arith.constant 8 : i32
    %10 = arith.muli %c0_i32, %c8_i32 : i32
    %11 = tpu.assume_multiple %10, 8 : i32
    %12 = arith.index_cast %11 : i32 to index
    %c0_12 = arith.constant 0 : index
    %13 = vector.load %arg8[%12, %c0_12] : memref<64x64xf32, #tpu.memory_space<vmem>>, vector<8x32xf32>
    %cst_13 = arith.constant dense<0.000000e+00> : vector<8x32xf32>
    %14 = tpu.matmul %9, %1, %cst_13 {dimension_numbers = #tpu.dot_dimension_numbers<[1], [0], [0], [1], [0, 0, 1, 1], [], []>} : vector<8x32xf32>, vector<32x32xf32>, vector<8x32xf32> -> vector<8x32xf32>
    %15 = arith.addf %13, %14 : vector<8x32xf32>
    %16 = math.tanh %15 : vector<8x32xf32>
    %c1_i32 = arith.constant 1 : i32
    %c8_i32_14 = arith.constant 8 : i32
    %17 = arith.muli %c1_i32, %c8_i32_14 : i32
    %18 = tpu.assume_multiple %17, 8 : i32
    %19 = arith.index_cast %18 : i32 to index
    %c0_15 = arith.constant 0 : index
    %20 = vector.load %arg8[%19, %c0_15] : memref<64x64xf32, #tpu.memory_space<vmem>>, vector<8x32xf32>
    %cst_16 = arith.constant dense<0.000000e+00> : vector<8x32xf32>
    %21 = tpu.matmul %16, %1, %cst_16 {dimension_numbers = #tpu.dot_dimension_numbers<[1], [0], [0], [1], [0, 0, 1, 1], [], []>} : vector<8x32xf32>, vector<32x32xf32>, vector<8x32xf32> -> vector<8x32xf32>
    %22 = arith.addf %20, %21 : vector<8x32xf32>
    %23 = math.tanh %22 : vector<8x32xf32>
    %c2_i32 = arith.constant 2 : i32
    %c8_i32_17 = arith.constant 8 : i32
    %24 = arith.muli %c2_i32, %c8_i32_17 : i32
    %25 = tpu.assume_multiple %24, 8 : i32
    %26 = arith.index_cast %25 : i32 to index
    %c0_18 = arith.constant 0 : index
    %27 = vector.load %arg8[%26, %c0_18] : memref<64x64xf32, #tpu.memory_space<vmem>>, vector<8x32xf32>
    %cst_19 = arith.constant dense<0.000000e+00> : vector<8x32xf32>
    %28 = tpu.matmul %23, %1, %cst_19 {dimension_numbers = #tpu.dot_dimension_numbers<[1], [0], [0], [1], [0, 0, 1, 1], [], []>} : vector<8x32xf32>, vector<32x32xf32>, vector<8x32xf32> -> vector<8x32xf32>
    %29 = arith.addf %27, %28 : vector<8x32xf32>
    %30 = math.tanh %29 : vector<8x32xf32>
    %c3_i32 = arith.constant 3 : i32
    %c8_i32_20 = arith.constant 8 : i32
    %31 = arith.muli %c3_i32, %c8_i32_20 : i32
    %32 = tpu.assume_multiple %31, 8 : i32
    %33 = arith.index_cast %32 : i32 to index
    %c0_21 = arith.constant 0 : index
    %34 = vector.load %arg8[%33, %c0_21] : memref<64x64xf32, #tpu.memory_space<vmem>>, vector<8x32xf32>
    %cst_22 = arith.constant dense<0.000000e+00> : vector<8x32xf32>
    %35 = tpu.matmul %30, %1, %cst_22 {dimension_numbers = #tpu.dot_dimension_numbers<[1], [0], [0], [1], [0, 0, 1, 1], [], []>} : vector<8x32xf32>, vector<32x32xf32>, vector<8x32xf32> -> vector<8x32xf32>
    %36 = arith.addf %34, %35 : vector<8x32xf32>
    %37 = math.tanh %36 : vector<8x32xf32>
    %c4_i32 = arith.constant 4 : i32
    %c8_i32_23 = arith.constant 8 : i32
    %38 = arith.muli %c4_i32, %c8_i32_23 : i32
    %39 = tpu.assume_multiple %38, 8 : i32
    %40 = arith.index_cast %39 : i32 to index
    %c0_24 = arith.constant 0 : index
    %41 = vector.load %arg8[%40, %c0_24] : memref<64x64xf32, #tpu.memory_space<vmem>>, vector<8x32xf32>
    %cst_25 = arith.constant dense<0.000000e+00> : vector<8x32xf32>
    %42 = tpu.matmul %37, %1, %cst_25 {dimension_numbers = #tpu.dot_dimension_numbers<[1], [0], [0], [1], [0, 0, 1, 1], [], []>} : vector<8x32xf32>, vector<32x32xf32>, vector<8x32xf32> -> vector<8x32xf32>
    %43 = arith.addf %41, %42 : vector<8x32xf32>
    %44 = math.tanh %43 : vector<8x32xf32>
    %c5_i32 = arith.constant 5 : i32
    %c8_i32_26 = arith.constant 8 : i32
    %45 = arith.muli %c5_i32, %c8_i32_26 : i32
    %46 = tpu.assume_multiple %45, 8 : i32
    %47 = arith.index_cast %46 : i32 to index
    %c0_27 = arith.constant 0 : index
    %48 = vector.load %arg8[%47, %c0_27] : memref<64x64xf32, #tpu.memory_space<vmem>>, vector<8x32xf32>
    %cst_28 = arith.constant dense<0.000000e+00> : vector<8x32xf32>
    %49 = tpu.matmul %44, %1, %cst_28 {dimension_numbers = #tpu.dot_dimension_numbers<[1], [0], [0], [1], [0, 0, 1, 1], [], []>} : vector<8x32xf32>, vector<32x32xf32>, vector<8x32xf32> -> vector<8x32xf32>
    %50 = arith.addf %48, %49 : vector<8x32xf32>
    %51 = math.tanh %50 : vector<8x32xf32>
    %c6_i32 = arith.constant 6 : i32
    %c8_i32_29 = arith.constant 8 : i32
    %52 = arith.muli %c6_i32, %c8_i32_29 : i32
    %53 = tpu.assume_multiple %52, 8 : i32
    %54 = arith.index_cast %53 : i32 to index
    %c0_30 = arith.constant 0 : index
    %55 = vector.load %arg8[%54, %c0_30] : memref<64x64xf32, #tpu.memory_space<vmem>>, vector<8x32xf32>
    %cst_31 = arith.constant dense<0.000000e+00> : vector<8x32xf32>
    %56 = tpu.matmul %51, %1, %cst_31 {dimension_numbers = #tpu.dot_dimension_numbers<[1], [0], [0], [1], [0, 0, 1, 1], [], []>} : vector<8x32xf32>, vector<32x32xf32>, vector<8x32xf32> -> vector<8x32xf32>
    %57 = arith.addf %55, %56 : vector<8x32xf32>
    %58 = math.tanh %57 : vector<8x32xf32>
    %c7_i32 = arith.constant 7 : i32
    %c8_i32_32 = arith.constant 8 : i32
    %59 = arith.muli %c7_i32, %c8_i32_32 : i32
    %60 = tpu.assume_multiple %59, 8 : i32
    %61 = arith.index_cast %60 : i32 to index
    %c0_33 = arith.constant 0 : index
    %62 = vector.load %arg8[%61, %c0_33] : memref<64x64xf32, #tpu.memory_space<vmem>>, vector<8x32xf32>
    %cst_34 = arith.constant dense<0.000000e+00> : vector<8x32xf32>
    %63 = tpu.matmul %58, %1, %cst_34 {dimension_numbers = #tpu.dot_dimension_numbers<[1], [0], [0], [1], [0, 0, 1, 1], [], []>} : vector<8x32xf32>, vector<32x32xf32>, vector<8x32xf32> -> vector<8x32xf32>
    %64 = arith.addf %62, %63 : vector<8x32xf32>
    %65 = math.tanh %64 : vector<8x32xf32>
    %c8_i32_35 = arith.constant 8 : i32
    %c0_i32_36 = arith.constant 0 : i32
    %c8_i32_37 = arith.constant 8 : i32
    %66 = arith.muli %c0_i32_36, %c8_i32_37 : i32
    %67 = tpu.assume_multiple %66, 8 : i32
    %68 = arith.index_cast %67 : i32 to index
    %c32 = arith.constant 32 : index
    %69 = vector.load %arg8[%68, %c32] : memref<64x64xf32, #tpu.memory_space<vmem>>, vector<8x32xf32>
    %cst_38 = arith.constant dense<0.000000e+00> : vector<8x32xf32>
    %70 = tpu.matmul %65, %2, %cst_38 {dimension_numbers = #tpu.dot_dimension_numbers<[1], [0], [0], [1], [0, 0, 1, 1], [], []>} : vector<8x32xf32>, vector<32x32xf32>, vector<8x32xf32> -> vector<8x32xf32>
    %71 = arith.addf %69, %70 : vector<8x32xf32>
    %72 = math.tanh %71 : vector<8x32xf32>
    %73 = arith.index_cast %67 : i32 to index
    %c32_39 = arith.constant 32 : index
    %74 = vector.load %arg8[%73, %c32_39] : memref<64x64xf32, #tpu.memory_space<vmem>>, vector<8x32xf32>
    tpu.vector_store %arg8[%73, %c32_39], %72 {strides = array<i32>} : memref<64x64xf32, #tpu.memory_space<vmem>>, vector<8x32xf32>,
    %c1_i32_40 = arith.constant 1 : i32
    %c8_i32_41 = arith.constant 8 : i32
    %75 = arith.muli %c1_i32_40, %c8_i32_41 : i32
    %76 = tpu.assume_multiple %75, 8 : i32
    %77 = arith.index_cast %76 : i32 to index
    %c32_42 = arith.constant 32 : index
    %78 = vector.load %arg8[%77, %c32_42] : memref<64x64xf32, #tpu.memory_space<vmem>>, vector<8x32xf32>
    %cst_43 = arith.constant dense<0.000000e+00> : vector<8x32xf32>
    %79 = tpu.matmul %72, %2, %cst_43 {dimension_numbers = #tpu.dot_dimension_numbers<[1], [0], [0], [1], [0, 0, 1, 1], [], []>} : vector<8x32xf32>, vector<32x32xf32>, vector<8x32xf32> -> vector<8x32xf32>
    %80 = arith.addf %78, %79 : vector<8x32xf32>
    %81 = math.tanh %80 : vector<8x32xf32>
    %82 = arith.index_cast %76 : i32 to index
    %c32_44 = arith.constant 32 : index
    %83 = vector.load %arg8[%82, %c32_44] : memref<64x64xf32, #tpu.memory_space<vmem>>, vector<8x32xf32>
    tpu.vector_store %arg8[%82, %c32_44], %81 {strides = array<i32>} : memref<64x64xf32, #tpu.memory_space<vmem>>, vector<8x32xf32>,
    %c2_i32_45 = arith.constant 2 : i32
    %c8_i32_46 = arith.constant 8 : i32
    %84 = arith.muli %c2_i32_45, %c8_i32_46 : i32
    %85 = tpu.assume_multiple %84, 8 : i32
    %86 = arith.index_cast %85 : i32 to index
    %c32_47 = arith.constant 32 : index
    %87 = vector.load %arg8[%86, %c32_47] : memref<64x64xf32, #tpu.memory_space<vmem>>, vector<8x32xf32>
    %cst_48 = arith.constant dense<0.000000e+00> : vector<8x32xf32>
    %88 = tpu.matmul %81, %2, %cst_48 {dimension_numbers = #tpu.dot_dimension_numbers<[1], [0], [0], [1], [0, 0, 1, 1], [], []>} : vector<8x32xf32>, vector<32x32xf32>, vector<8x32xf32> -> vector<8x32xf32>
    %89 = arith.addf %87, %88 : vector<8x32xf32>
    %90 = math.tanh %89 : vector<8x32xf32>
    %91 = arith.index_cast %85 : i32 to index
    %c32_49 = arith.constant 32 : index
    %92 = vector.load %arg8[%91, %c32_49] : memref<64x64xf32, #tpu.memory_space<vmem>>, vector<8x32xf32>
    tpu.vector_store %arg8[%91, %c32_49], %90 {strides = array<i32>} : memref<64x64xf32, #tpu.memory_space<vmem>>, vector<8x32xf32>,
    %c3_i32_50 = arith.constant 3 : i32
    %c8_i32_51 = arith.constant 8 : i32
    %93 = arith.muli %c3_i32_50, %c8_i32_51 : i32
    %94 = tpu.assume_multiple %93, 8 : i32
    %95 = arith.index_cast %94 : i32 to index
    %c32_52 = arith.constant 32 : index
    %96 = vector.load %arg8[%95, %c32_52] : memref<64x64xf32, #tpu.memory_space<vmem>>, vector<8x32xf32>
    %cst_53 = arith.constant dense<0.000000e+00> : vector<8x32xf32>
    %97 = tpu.matmul %90, %2, %cst_53 {dimension_numbers = #tpu.dot_dimension_numbers<[1], [0], [0], [1], [0, 0, 1, 1], [], []>} : vector<8x32xf32>, vector<32x32xf32>, vector<8x32xf32> -> vector<8x32xf32>
    %98 = arith.addf %96, %97 : vector<8x32xf32>
    %99 = math.tanh %98 : vector<8x32xf32>
    %100 = arith.index_cast %94 : i32 to index
    %c32_54 = arith.constant 32 : index
    %101 = vector.load %arg8[%100, %c32_54] : memref<64x64xf32, #tpu.memory_space<vmem>>, vector<8x32xf32>
    tpu.vector_store %arg8[%100, %c32_54], %99 {strides = array<i32>} : memref<64x64xf32, #tpu.memory_space<vmem>>, vector<8x32xf32>,
    %c4_i32_55 = arith.constant 4 : i32
    %c8_i32_56 = arith.constant 8 : i32
    %102 = arith.muli %c4_i32_55, %c8_i32_56 : i32
    %103 = tpu.assume_multiple %102, 8 : i32
    %104 = arith.index_cast %103 : i32 to index
    %c32_57 = arith.constant 32 : index
    %105 = vector.load %arg8[%104, %c32_57] : memref<64x64xf32, #tpu.memory_space<vmem>>, vector<8x32xf32>
    %cst_58 = arith.constant dense<0.000000e+00> : vector<8x32xf32>
    %106 = tpu.matmul %99, %2, %cst_58 {dimension_numbers = #tpu.dot_dimension_numbers<[1], [0], [0], [1], [0, 0, 1, 1], [], []>} : vector<8x32xf32>, vector<32x32xf32>, vector<8x32xf32> -> vector<8x32xf32>
    %107 = arith.addf %105, %106 : vector<8x32xf32>
    %108 = math.tanh %107 : vector<8x32xf32>
    %109 = arith.index_cast %103 : i32 to index
    %c32_59 = arith.constant 32 : index
    %110 = vector.load %arg8[%109, %c32_59] : memref<64x64xf32, #tpu.memory_space<vmem>>, vector<8x32xf32>
    tpu.vector_store %arg8[%109, %c32_59], %108 {strides = array<i32>} : memref<64x64xf32, #tpu.memory_space<vmem>>, vector<8x32xf32>,
    %c5_i32_60 = arith.constant 5 : i32
    %c8_i32_61 = arith.constant 8 : i32
    %111 = arith.muli %c5_i32_60, %c8_i32_61 : i32
    %112 = tpu.assume_multiple %111, 8 : i32
    %113 = arith.index_cast %112 : i32 to index
    %c32_62 = arith.constant 32 : index
    %114 = vector.load %arg8[%113, %c32_62] : memref<64x64xf32, #tpu.memory_space<vmem>>, vector<8x32xf32>
    %cst_63 = arith.constant dense<0.000000e+00> : vector<8x32xf32>
    %115 = tpu.matmul %108, %2, %cst_63 {dimension_numbers = #tpu.dot_dimension_numbers<[1], [0], [0], [1], [0, 0, 1, 1], [], []>} : vector<8x32xf32>, vector<32x32xf32>, vector<8x32xf32> -> vector<8x32xf32>
    %116 = arith.addf %114, %115 : vector<8x32xf32>
    %117 = math.tanh %116 : vector<8x32xf32>
    %118 = arith.index_cast %112 : i32 to index
    %c32_64 = arith.constant 32 : index
    %119 = vector.load %arg8[%118, %c32_64] : memref<64x64xf32, #tpu.memory_space<vmem>>, vector<8x32xf32>
    tpu.vector_store %arg8[%118, %c32_64], %117 {strides = array<i32>} : memref<64x64xf32, #tpu.memory_space<vmem>>, vector<8x32xf32>,
    %c6_i32_65 = arith.constant 6 : i32
    %c8_i32_66 = arith.constant 8 : i32
    %120 = arith.muli %c6_i32_65, %c8_i32_66 : i32
    %121 = tpu.assume_multiple %120, 8 : i32
    %122 = arith.index_cast %121 : i32 to index
    %c32_67 = arith.constant 32 : index
    %123 = vector.load %arg8[%122, %c32_67] : memref<64x64xf32, #tpu.memory_space<vmem>>, vector<8x32xf32>
    %cst_68 = arith.constant dense<0.000000e+00> : vector<8x32xf32>
    %124 = tpu.matmul %117, %2, %cst_68 {dimension_numbers = #tpu.dot_dimension_numbers<[1], [0], [0], [1], [0, 0, 1, 1], [], []>} : vector<8x32xf32>, vector<32x32xf32>, vector<8x32xf32> -> vector<8x32xf32>
    %125 = arith.addf %123, %124 : vector<8x32xf32>
    %126 = math.tanh %125 : vector<8x32xf32>
    %127 = arith.index_cast %121 : i32 to index
    %c32_69 = arith.constant 32 : index
    %128 = vector.load %arg8[%127, %c32_69] : memref<64x64xf32, #tpu.memory_space<vmem>>, vector<8x32xf32>
    tpu.vector_store %arg8[%127, %c32_69], %126 {strides = array<i32>} : memref<64x64xf32, #tpu.memory_space<vmem>>, vector<8x32xf32>,
    %c7_i32_70 = arith.constant 7 : i32
    %c8_i32_71 = arith.constant 8 : i32
    %129 = arith.muli %c7_i32_70, %c8_i32_71 : i32
    %130 = tpu.assume_multiple %129, 8 : i32
    %131 = arith.index_cast %130 : i32 to index
    %c32_72 = arith.constant 32 : index
    %132 = vector.load %arg8[%131, %c32_72] : memref<64x64xf32, #tpu.memory_space<vmem>>, vector<8x32xf32>
    %cst_73 = arith.constant dense<0.000000e+00> : vector<8x32xf32>
    %133 = tpu.matmul %126, %2, %cst_73 {dimension_numbers = #tpu.dot_dimension_numbers<[1], [0], [0], [1], [0, 0, 1, 1], [], []>} : vector<8x32xf32>, vector<32x32xf32>, vector<8x32xf32> -> vector<8x32xf32>
    %134 = arith.addf %132, %133 : vector<8x32xf32>
    %135 = math.tanh %134 : vector<8x32xf32>
    %136 = arith.index_cast %130 : i32 to index
    %c32_74 = arith.constant 32 : index
    %137 = vector.load %arg8[%136, %c32_74] : memref<64x64xf32, #tpu.memory_space<vmem>>, vector<8x32xf32>
    tpu.vector_store %arg8[%136, %c32_74], %135 {strides = array<i32>} : memref<64x64xf32, #tpu.memory_space<vmem>>, vector<8x32xf32>,
    %c8_i32_75 = arith.constant 8 : i32
    %c0_76 = arith.constant 0 : index
    %c0_77 = arith.constant 0 : index
    %138 = vector.load %arg8[%c0_76, %c0_77] : memref<64x64xf32, #tpu.memory_space<vmem>>, vector<64x64xf32>
    %139 = vector.extract_strided_slice %138 {offsets = [0, 32], sizes = [64, 32], strides = [1, 1]} : vector<64x64xf32> to vector<64x32xf32>
    %c0_78 = arith.constant 0 : index
    %c0_79 = arith.constant 0 : index
    %140 = vector.load %arg5[%c0_78, %c0_79] : memref<1x32xf32, #tpu.memory_space<vmem>>, vector<1x32xf32>
    %141 = vector.broadcast %140 : vector<1x32xf32> to vector<64x32xf32>
    %142 = arith.mulf %139, %141 : vector<64x32xf32>
    %cst_80 = arith.constant dense<0.000000e+00> : vector<64xf32>
    %143 = vector.multi_reduction <add>, %142, %cst_80 [1] : vector<64x32xf32> to vector<64xf32>
    %144 = vector.shape_cast %143 : vector<64xf32> to vector<64x1xf32>
    %c0_81 = arith.constant 0 : index
    %145 = memref.load %arg6[%c0_81] : memref<1xf32, #tpu.memory_space<smem>>
    %146 = vector.broadcast %145 : f32 to vector<64x1xf32>
    %147 = arith.addf %144, %146 : vector<64x1xf32>
    %c0_82 = arith.constant 0 : index
    %c0_83 = arith.constant 0 : index
    %148 = vector.load %arg7[%c0_82, %c0_83] : memref<64x1xf32, #tpu.memory_space<vmem>>, vector<64x1xf32>
    tpu.vector_store %arg7[%c0_82, %c0_83], %147 {strides = array<i32>} : memref<64x1xf32, #tpu.memory_space<vmem>>, vector<64x1xf32>,
    return
  }
}

</mosaic_0001>

<llo_original>
// kernel: tpu_custom_call.1
$region0: #{tpu_custom_call.1}
  #allocation0 [shape = 'u32[]', space=smem, size = 0x4, offset = 0x4, fixed_abs, tag = 'smem constant byte address 0x4 - core index']
  #allocation1 [shape = 'u32[144,128]{1,0:T(1,128)}', space=vmem, size = 0x12000, scoped, tag = 'internal scratch']
  #allocation2 [shape = 'f32[64,64]{1,0:T(8,128)}', space=vmem, size = 0x8000, scoped, tag = 'scratch operand']
  #allocation3 [shape = 'f32[1]{0:T(128)S(6)}', space=smem, size = 0x200, scoped, tag = 'scoped memory for tpu_custom_call.1']
  %s0 = inlined_call_operand.vmem [shape: f32[64,4], index: 0, kind: input, shape index: {}]
  %s1 = inlined_call_operand.vmem [shape: f32[4,64], index: 1, kind: input, shape index: {}]
  %s2 = inlined_call_operand.vmem [shape: f32[1,64], index: 2, kind: input, shape index: {}]
  %s3 = inlined_call_operand.vmem [shape: f32[32,32], index: 3, kind: input, shape index: {}]
  %s4 = inlined_call_operand.vmem [shape: f32[32,32], index: 4, kind: input, shape index: {}]
  %s5 = inlined_call_operand.vmem [shape: f32[1,32], index: 5, kind: input, shape index: {}]
  %s6 = inlined_call_operand.<no memory space> [shape: f32[1], index: 6, kind: input, shape index: {}]
  %s7 = inlined_call_operand.vmem [shape: f32[64,1], index: 7, kind: output, shape index: {}]
  %s8 = sld [smem:[#allocation0]]
  $region38: #{tpu_custom_call.1} parent=0
    _
  %s10 = ssub.s32 1, %s8
  %s11 = scalar_select 0, %s10, %s8
  %12 = sst [smem:[#allocation3]] %s6
  // Predicated region
  $region2: #{tpu_custom_call.1} parent=0 // pred_check
    _
  $region3: #{tpu_custom_call.1} parent=0 // pred_check_branch
    %14 = sbr.rel (0) target = $region5
  $region4: #{tpu_custom_call.1} parent=0 // pred_region
    _
  $region5: #{tpu_custom_call.1} parent=0 // pred_fallthru
    _
  // Predicated region
  $region6: #{tpu_custom_call.1} parent=0 // pred_check
    _
  $region7: #{tpu_custom_call.1} parent=0 // pred_check_branch
    %16 = sbr.rel (0) target = $region9
  $region8: #{tpu_custom_call.1} parent=0 // pred_region
    _
  $region9: #{tpu_custom_call.1} parent=0 // pred_fallthru
    _
  // Predicated region
  $region10: #{tpu_custom_call.1} parent=0 // pred_check
    _
  $region11: #{tpu_custom_call.1} parent=0 // pred_check_branch
    %18 = sbr.rel (0) target = $region13
  $region12: #{tpu_custom_call.1} parent=0 // pred_region
    _
  $region13: #{tpu_custom_call.1} parent=0 // pred_fallthru
    _
  // Predicated region
  $region14: #{tpu_custom_call.1} parent=0 // pred_check
    _
  $region15: #{tpu_custom_call.1} parent=0 // pred_check_branch
    %20 = sbr.rel (0) target = $region17
  $region16: #{tpu_custom_call.1} parent=0 // pred_region
    _
  $region17: #{tpu_custom_call.1} parent=0 // pred_fallthru
    _
  // Predicated region
  $region18: #{tpu_custom_call.1} parent=0 // pred_check
    _
  $region19: #{tpu_custom_call.1} parent=0 // pred_check_branch
    %22 = sbr.rel (0) target = $region21
  $region20: #{tpu_custom_call.1} parent=0 // pred_region
    _
  $region21: #{tpu_custom_call.1} parent=0 // pred_fallthru
    _
  // Predicated region
  $region22: #{tpu_custom_call.1} parent=0 // pred_check
    _
  $region23: #{tpu_custom_call.1} parent=0 // pred_check_branch
    %24 = sbr.rel (0) target = $region25
  $region24: #{tpu_custom_call.1} parent=0 // pred_region
    _
  $region25: #{tpu_custom_call.1} parent=0 // pred_fallthru
    _
  // Predicated region
  $region26: #{tpu_custom_call.1} parent=0 // pred_check
    _
  $region27: #{tpu_custom_call.1} parent=0 // pred_check_branch
    %26 = sbr.rel (0) target = $region29
  $region28: #{tpu_custom_call.1} parent=0 // pred_region
    _
  $region29: #{tpu_custom_call.1} parent=0 // pred_fallthru
    _
  %v27 = vld [vmem:[%s0] sm:$0xff]
  %v28 = vld [vmem:[%s0 + $0x8] sm:$0xff]
  %v29 = vld [vmem:[%s0 + $0x10] sm:$0xff]
  %v30 = vld [vmem:[%s0 + $0x18] sm:$0xff]
  %v31 = vld [vmem:[%s0 + $0x20] sm:$0xff]
  %v32 = vld [vmem:[%s0 + $0x28] sm:$0xff]
  %v33 = vld [vmem:[%s0 + $0x30] sm:$0xff]
  %v34 = vld [vmem:[%s0 + $0x38] sm:$0xff]
  %v35 = vld [vmem:[%s3] sm:$0xff]
  %v36 = vld [vmem:[%s3 + $0x8] sm:$0xff]
  %v37 = vld [vmem:[%s3 + $0x10] sm:$0xff]
  %v38 = vld [vmem:[%s3 + $0x18] sm:$0xff]
  %v39 = vld [vmem:[%s4] sm:$0xff]
  %v40 = vld [vmem:[%s4 + $0x8] sm:$0xff]
  %v41 = vld [vmem:[%s4 + $0x10] sm:$0xff]
  %v42 = vld [vmem:[%s4 + $0x18] sm:$0xff]
  %v43 = vld [vmem:[%s1] sm:$0xf]
  %v44 = vld [vmem:[%s2] sm:$0x1]
  %v46 = vlaneseq
  %v47 = vshrl.u32 %v46, 7
  %v48 = vsub.s32 0, %v47
  %v49 = vrot.slane %v44, %v48
  %vm51 = vcmask 31744
  %v53 = vsel %vm51, %v27, 0
  %v56 = vsel %vm51, %v28, 0
  %v59 = vsel %vm51, %v29, 0
  %v62 = vsel %vm51, %v30, 0
  %v65 = vsel %vm51, %v31, 0
  %v68 = vsel %vm51, %v32, 0
  %v71 = vsel %vm51, %v33, 0
  %v74 = vsel %vm51, %v34, 0
  %vm76 = vcmask 1043456
  %v78 = vsel %vm76, %v43, 0
  %80 = vmatprep.subr.mxu0 0.0
  %81 = vmatpush1.msra.mxu0 %v78
  %82 = vmatprep.subr.mxu0 0.0
  %83 = vmatpush1.msra.mxu0 0.0
  %84 = vmatprep.subr.mxu0 0.0
  %85 = vmatpush1.msra.mxu0 0.0
  %86 = vmatprep.subr.mxu0 0.0
  %87 = vmatpush1.msra.mxu0 0.0
  %88 = vmatprep.subr.mxu0 0.0
  %89 = vmatpush1.msra.mxu0 0.0
  %90 = vmatprep.subr.mxu0 0.0
  %91 = vmatpush1.msra.mxu0 0.0
  %92 = vmatprep.subr.mxu0 0.0
  %93 = vmatpush1.msra.mxu0 0.0
  %94 = vmatprep.subr.mxu0 0.0
  %95 = vmatpush1.msra.mxu0 0.0
  %96 = vmatprep.subr.mxu0 0.0
  %97 = vmatpush1.msra.mxu0 0.0
  %98 = vmatprep.subr.mxu0 0.0
  %99 = vmatpush1.msra.mxu0 0.0
  %100 = vmatprep.subr.mxu0 0.0
  %101 = vmatpush1.msra.mxu0 0.0
  %102 = vmatprep.subr.mxu0 0.0
  %103 = vmatpush1.msra.mxu0 0.0
  %104 = vmatprep.subr.mxu0 0.0
  %105 = vmatpush1.msra.mxu0 0.0
  %106 = vmatprep.subr.mxu0 0.0
  %107 = vmatpush1.msra.mxu0 0.0
  %108 = vmatprep.subr.mxu0 0.0
  %109 = vmatpush1.msra.mxu0 0.0
  %110 = vmatprep.subr.mxu0 0.0
  %111 = vmatpush1.msra.mxu0 0.0
  %112 = vmatprep.subr.mxu0 0.0
  %113 = vmatpush1.msra.mxu0 0.0
  %114 = vmatprep.subr.mxu0 0.0
  %115 = vmatpush1.msra.mxu0 0.0
  %116 = vmatprep.subr.mxu0 0.0
  %117 = vmatpush1.msra.mxu0 0.0
  %118 = vmatprep.subr.mxu0 0.0
  %119 = vmatpush1.msra.mxu0 0.0
  %120 = vmatprep.subr.mxu0 0.0
  %121 = vmatpush1.msra.mxu0 0.0
  %122 = vmatprep.subr.mxu0 0.0
  %123 = vmatpush1.msra.mxu0 0.0
  %124 = vmatprep.subr.mxu0 0.0
  %125 = vmatpush1.msra.mxu0 0.0
  %126 = vmatprep.subr.mxu0 0.0
  %127 = vmatpush1.msra.mxu0 0.0
  %128 = vmatprep.subr.mxu0 0.0
  %129 = vmatpush1.msra.mxu0 0.0
  %130 = vmatprep.subr.mxu0 0.0
  %131 = vmatpush1.msra.mxu0 0.0
  %132 = vmatprep.subr.mxu0 0.0
  %133 = vmatpush1.msra.mxu0 0.0
  %134 = vmatprep.subr.mxu0 0.0
  %135 = vmatpush1.msra.mxu0 0.0
  %136 = vmatprep.subr.mxu0 0.0
  %137 = vmatpush1.msra.mxu0 0.0
  %138 = vmatprep.subr.mxu0 0.0
  %139 = vmatpush1.msra.mxu0 0.0
  %140 = vmatprep.subr.mxu0 0.0
  %141 = vmatpush1.msra.mxu0 0.0
  %142 = vmatprep.subr.mxu0 0.0
  %143 = vmatpush1.msra.mxu0 0.0
  %144 = vmatprep.mubr.f32.mxu0 0.0
  %145 = vmatmul.mubr.f32.gmra.mrb[0].mxu0 %v53
  %v146 = vpop.f32.mrb[0].mxu0
  %v147 = vadd.f32 %v49, %v146
  %v148 = vpop.f32.mrb[0].mxu0
  %149 = vmatprep.mubr.f32.mxu0 0.0
  %150 = vmatmul.mubr.f32.gmra.mrb[0].mxu0 %v56
  %v151 = vpop.f32.mrb[0].mxu0
  %v152 = vadd.f32 %v49, %v151
  %v153 = vpop.f32.mrb[0].mxu0
  %154 = vmatprep.mubr.f32.mxu0 0.0
  %155 = vmatmul.mubr.f32.gmra.mrb[0].mxu0 %v59
  %v156 = vpop.f32.mrb[0].mxu0
  %v157 = vadd.f32 %v49, %v156
  %v158 = vpop.f32.mrb[0].mxu0
  %159 = vmatprep.mubr.f32.mxu0 0.0
  %160 = vmatmul.mubr.f32.gmra.mrb[0].mxu0 %v62
  %v161 = vpop.f32.mrb[0].mxu0
  %v162 = vadd.f32 %v49, %v161
  %v163 = vpop.f32.mrb[0].mxu0
  %164 = vmatprep.mubr.f32.mxu0 0.0
  %165 = vmatmul.mubr.f32.gmra.mrb[0].mxu0 %v65
  %v166 = vpop.f32.mrb[0].mxu0
  %v167 = vadd.f32 %v49, %v166
  %v168 = vpop.f32.mrb[0].mxu0
  %169 = vmatprep.mubr.f32.mxu0 0.0
  %170 = vmatmul.mubr.f32.gmra.mrb[0].mxu0 %v68
  %v171 = vpop.f32.mrb[0].mxu0
  %v172 = vadd.f32 %v49, %v171
  %v173 = vpop.f32.mrb[0].mxu0
  %174 = vmatprep.mubr.f32.mxu0 0.0
  %175 = vmatmul.mubr.f32.gmra.mrb[0].mxu0 %v71
  %v176 = vpop.f32.mrb[0].mxu0
  %v177 = vadd.f32 %v49, %v176
  %v178 = vpop.f32.mrb[0].mxu0
  %179 = vmatprep.mubr.f32.mxu0 0.0
  %180 = vmatmul.mubr.f32.gmra.mrb[0].mxu0 %v74
  %v181 = vpop.f32.mrb[0].mxu0
  %v182 = vadd.f32 %v49, %v181
  %v183 = vpop.f32.mrb[0].mxu0
  %184 = vdwg.mxu0
  %vm185 = vcmask 523264
  %186 = vst.msk [vmem:[#allocation2] sm:$0xff] %vm185, %v147
  %187 = vst.msk [vmem:[#allocation2 + $0x8] sm:$0xff] %vm185, %v152
  %188 = vst.msk [vmem:[#allocation2 + $0x10] sm:$0xff] %vm185, %v157
  %189 = vst.msk [vmem:[#allocation2 + $0x18] sm:$0xff] %vm185, %v162
  %190 = vst.msk [vmem:[#allocation2 + $0x20] sm:$0xff] %vm185, %v167
  %191 = vst.msk [vmem:[#allocation2 + $0x28] sm:$0xff] %vm185, %v172
  %192 = vst.msk [vmem:[#allocation2 + $0x30] sm:$0xff] %vm185, %v177
  %193 = vst.msk [vmem:[#allocation2 + $0x38] sm:$0xff] %vm185, %v182
  %v194 = vld [vmem:[#allocation2] sm:$0xff]
  %vm195 = vcmask 261120
  %v197 = vsel %vm195, 0.0, 0
  %199 = vmatprep.subr.mxu0 0.0
  %200 = vmatpush1.msra.mxu0 %v35
  %201 = vmatprep.subr.mxu0 0.0
  %202 = vmatpush1.msra.mxu0 %v36
  %203 = vmatprep.subr.mxu0 0.0
  %204 = vmatpush1.msra.mxu0 %v37
  %205 = vmatprep.subr.mxu0 0.0
  %206 = vmatpush1.msra.mxu0 %v38
  %207 = vmatprep.subr.mxu0 0.0
  %208 = vmatpush1.msra.mxu0 0.0
  %209 = vmatprep.subr.mxu0 0.0
  %210 = vmatpush1.msra.mxu0 0.0
  %211 = vmatprep.subr.mxu0 0.0
  %212 = vmatpush1.msra.mxu0 0.0
  %213 = vmatprep.subr.mxu0 0.0
  %214 = vmatpush1.msra.mxu0 0.0
  %215 = vmatprep.subr.mxu0 0.0
  %216 = vmatpush1.msra.mxu0 0.0
  %217 = vmatprep.subr.mxu0 0.0
  %218 = vmatpush1.msra.mxu0 0.0
  %219 = vmatprep.subr.mxu0 0.0
  %220 = vmatpush1.msra.mxu0 0.0
  %221 = vmatprep.subr.mxu0 0.0
  %222 = vmatpush1.msra.mxu0 0.0
  %223 = vmatprep.subr.mxu0 0.0
  %224 = vmatpush1.msra.mxu0 0.0
  %225 = vmatprep.subr.mxu0 0.0
  %226 = vmatpush1.msra.mxu0 0.0
  %227 = vmatprep.subr.mxu0 0.0
  %228 = vmatpush1.msra.mxu0 0.0
  %229 = vmatprep.subr.mxu0 0.0
  %230 = vmatpush1.msra.mxu0 0.0
  %231 = vmatprep.subr.mxu0 0.0
  %232 = vmatpush1.msra.mxu0 0.0
  %233 = vmatprep.subr.mxu0 0.0
  %234 = vmatpush1.msra.mxu0 0.0
  %235 = vmatprep.subr.mxu0 0.0
  %236 = vmatpush1.msra.mxu0 0.0
  %237 = vmatprep.subr.mxu0 0.0
  %238 = vmatpush1.msra.mxu0 0.0
  %239 = vmatprep.subr.mxu0 0.0
  %240 = vmatpush1.msra.mxu0 0.0
  %241 = vmatprep.subr.mxu0 0.0
  %242 = vmatpush1.msra.mxu0 0.0
  %243 = vmatprep.subr.mxu0 0.0
  %244 = vmatpush1.msra.mxu0 0.0
  %245 = vmatprep.subr.mxu0 0.0
  %246 = vmatpush1.msra.mxu0 0.0
  %247 = vmatprep.subr.mxu0 0.0
  %248 = vmatpush1.msra.mxu0 0.0
  %249 = vmatprep.subr.mxu0 0.0
  %250 = vmatpush1.msra.mxu0 0.0
  %251 = vmatprep.subr.mxu0 0.0
  %252 = vmatpush1.msra.mxu0 0.0
  %253 = vmatprep.subr.mxu0 0.0
  %254 = vmatpush1.msra.mxu0 0.0
  %255 = vmatprep.subr.mxu0 0.0
  %256 = vmatpush1.msra.mxu0 0.0
  %257 = vmatprep.subr.mxu0 0.0
  %258 = vmatpush1.msra.mxu0 0.0
  %259 = vmatprep.subr.mxu0 0.0
  %260 = vmatpush1.msra.mxu0 0.0
  %261 = vmatprep.subr.mxu0 0.0
  %262 = vmatpush1.msra.mxu0 0.0
  %263 = vmatprep.mubr.f32.mxu0 0.0
  %264 = vmatmul.mubr.f32.gmra.mrb[0].mxu0 %v197
  %v265 = vpop.f32.mrb[0].mxu0
  %v266 = vadd.f32 0.0, %v265
  %v267 = vpop.f32.mrb[0].mxu0
  %268 = vdwg.mxu0
  %v269 = vadd.f32 %v194, %v266
  %v270 = vtanh.pop %v269
  %s271 = scalar_lea.vmem [#allocation2], 8
  %v272 = vld [vmem:[%s271] sm:$0xff]
  %v274 = vsel %vm195, %v270, 0
  %276 = vmatprep.subr.mxu0 0.0
  %277 = vmatpush1.msra.mxu0 %v35
  %278 = vmatprep.subr.mxu0 0.0
  %279 = vmatpush1.msra.mxu0 %v36
  %280 = vmatprep.subr.mxu0 0.0
  %281 = vmatpush1.msra.mxu0 %v37
  %282 = vmatprep.subr.mxu0 0.0
  %283 = vmatpush1.msra.mxu0 %v38
  %284 = vmatprep.subr.mxu0 0.0
  %285 = vmatpush1.msra.mxu0 0.0
  %286 = vmatprep.subr.mxu0 0.0
  %287 = vmatpush1.msra.mxu0 0.0
  %288 = vmatprep.subr.mxu0 0.0
  %289 = vmatpush1.msra.mxu0 0.0
  %290 = vmatprep.subr.mxu0 0.0
  %291 = vmatpush1.msra.mxu0 0.0
  %292 = vmatprep.subr.mxu0 0.0
  %293 = vmatpush1.msra.mxu0 0.0
  %294 = vmatprep.subr.mxu0 0.0
  %295 = vmatpush1.msra.mxu0 0.0
  %296 = vmatprep.subr.mxu0 0.0
  %297 = vmatpush1.msra.mxu0 0.0
  %298 = vmatprep.subr.mxu0 0.0
  %299 = vmatpush1.msra.mxu0 0.0
  %300 = vmatprep.subr.mxu0 0.0
  %301 = vmatpush1.msra.mxu0 0.0
  %302 = vmatprep.subr.mxu0 0.0
  %303 = vmatpush1.msra.mxu0 0.0
  %304 = vmatprep.subr.mxu0 0.0
  %305 = vmatpush1.msra.mxu0 0.0
  %306 = vmatprep.subr.mxu0 0.0
  %307 = vmatpush1.msra.mxu0 0.0
  %308 = vmatprep.subr.mxu0 0.0
  %309 = vmatpush1.msra.mxu0 0.0
  %310 = vmatprep.subr.mxu0 0.0
  %311 = vmatpush1.msra.mxu0 0.0
  %312 = vmatprep.subr.mxu0 0.0
  %313 = vmatpush1.msra.mxu0 0.0
  %314 = vmatprep.subr.mxu0 0.0
  %315 = vmatpush1.msra.mxu0 0.0
  %316 = vmatprep.subr.mxu0 0.0
  %317 = vmatpush1.msra.mxu0 0.0
  %318 = vmatprep.subr.mxu0 0.0
  %319 = vmatpush1.msra.mxu0 0.0
  %320 = vmatprep.subr.mxu0 0.0
  %321 = vmatpush1.msra.mxu0 0.0
  %322 = vmatprep.subr.mxu0 0.0
  %323 = vmatpush1.msra.mxu0 0.0
  %324 = vmatprep.subr.mxu0 0.0
  %325 = vmatpush1.msra.mxu0 0.0
  %326 = vmatprep.subr.mxu0 0.0
  %327 = vmatpush1.msra.mxu0 0.0
  %328 = vmatprep.subr.mxu0 0.0
  %329 = vmatpush1.msra.mxu0 0.0
  %330 = vmatprep.subr.mxu0 0.0
  %331 = vmatpush1.msra.mxu0 0.0
  %332 = vmatprep.subr.mxu0 0.0
  %333 = vmatpush1.msra.mxu0 0.0
  %334 = vmatprep.subr.mxu0 0.0
  %335 = vmatpush1.msra.mxu0 0.0
  %336 = vmatprep.subr.mxu0 0.0
  %337 = vmatpush1.msra.mxu0 0.0
  %338 = vmatprep.subr.mxu0 0.0
  %339 = vmatpush1.msra.mxu0 0.0
  %340 = vmatprep.mubr.f32.mxu0 0.0
  %341 = vmatmul.mubr.f32.gmra.mrb[0].mxu0 %v274
  %v342 = vpop.f32.mrb[0].mxu0
  %v343 = vadd.f32 0.0, %v342
  %v344 = vpop.f32.mrb[0].mxu0
  %345 = vdwg.mxu0
  %v346 = vadd.f32 %v272, %v343
  %v347 = vtanh.pop %v346
  %s348 = scalar_lea.vmem [#allocation2], 16
  %v349 = vld [vmem:[%s348] sm:$0xff]
  %v351 = vsel %vm195, %v347, 0
  %353 = vmatprep.subr.mxu0 0.0
  %354 = vmatpush1.msra.mxu0 %v35
  %355 = vmatprep.subr.mxu0 0.0
  %356 = vmatpush1.msra.mxu0 %v36
  %357 = vmatprep.subr.mxu0 0.0
  %358 = vmatpush1.msra.mxu0 %v37
  %359 = vmatprep.subr.mxu0 0.0
  %360 = vmatpush1.msra.mxu0 %v38
  %361 = vmatprep.subr.mxu0 0.0
  %362 = vmatpush1.msra.mxu0 0.0
  %363 = vmatprep.subr.mxu0 0.0
  %364 = vmatpush1.msra.mxu0 0.0
  %365 = vmatprep.subr.mxu0 0.0
  %366 = vmatpush1.msra.mxu0 0.0
  %367 = vmatprep.subr.mxu0 0.0
  %368 = vmatpush1.msra.mxu0 0.0
  %369 = vmatprep.subr.mxu0 0.0
  %370 = vmatpush1.msra.mxu0 0.0
  %371 = vmatprep.subr.mxu0 0.0
  %372 = vmatpush1.msra.mxu0 0.0
  %373 = vmatprep.subr.mxu0 0.0
  %374 = vmatpush1.msra.mxu0 0.0
  %375 = vmatprep.subr.mxu0 0.0
  %376 = vmatpush1.msra.mxu0 0.0
  %377 = vmatprep.subr.mxu0 0.0
  %378 = vmatpush1.msra.mxu0 0.0
  %379 = vmatprep.subr.mxu0 0.0
  %380 = vmatpush1.msra.mxu0 0.0
  %381 = vmatprep.subr.mxu0 0.0
  %382 = vmatpush1.msra.mxu0 0.0
  %383 = vmatprep.subr.mxu0 0.0
  %384 = vmatpush1.msra.mxu0 0.0
  %385 = vmatprep.subr.mxu0 0.0
  %386 = vmatpush1.msra.mxu0 0.0
  %387 = vmatprep.subr.mxu0 0.0
  %388 = vmatpush1.msra.mxu0 0.0
  %389 = vmatprep.subr.mxu0 0.0
  %390 = vmatpush1.msra.mxu0 0.0
  %391 = vmatprep.subr.mxu0 0.0
  %392 = vmatpush1.msra.mxu0 0.0
  %393 = vmatprep.subr.mxu0 0.0
  %394 = vmatpush1.msra.mxu0 0.0
  %395 = vmatprep.subr.mxu0 0.0
  %396 = vmatpush1.msra.mxu0 0.0
  %397 = vmatprep.subr.mxu0 0.0
  %398 = vmatpush1.msra.mxu0 0.0
  %399 = vmatprep.subr.mxu0 0.0
  %400 = vmatpush1.msra.mxu0 0.0
  %401 = vmatprep.subr.mxu0 0.0
  %402 = vmatpush1.msra.mxu0 0.0
  %403 = vmatprep.subr.mxu0 0.0
  %404 = vmatpush1.msra.mxu0 0.0
  %405 = vmatprep.subr.mxu0 0.0
  %406 = vmatpush1.msra.mxu0 0.0
  %407 = vmatprep.subr.mxu0 0.0
  %408 = vmatpush1.msra.mxu0 0.0
  %409 = vmatprep.subr.mxu0 0.0
  %410 = vmatpush1.msra.mxu0 0.0
  %411 = vmatprep.subr.mxu0 0.0
  %412 = vmatpush1.msra.mxu0 0.0
  %413 = vmatprep.subr.mxu0 0.0
  %414 = vmatpush1.msra.mxu0 0.0
  %415 = vmatprep.subr.mxu0 0.0
  %416 = vmatpush1.msra.mxu0 0.0
  %417 = vmatprep.mubr.f32.mxu0 0.0
  %418 = vmatmul.mubr.f32.gmra.mrb[0].mxu0 %v351
  %v419 = vpop.f32.mrb[0].mxu0
  %v420 = vadd.f32 0.0, %v419
  %v421 = vpop.f32.mrb[0].mxu0
  %422 = vdwg.mxu0
  %v423 = vadd.f32 %v349, %v420
  %v424 = vtanh.pop %v423
  %s425 = scalar_lea.vmem [#allocation2], 24
  %v426 = vld [vmem:[%s425] sm:$0xff]
  %v428 = vsel %vm195, %v424, 0
  %430 = vmatprep.subr.mxu0 0.0
  %431 = vmatpush1.msra.mxu0 %v35
  %432 = vmatprep.subr.mxu0 0.0
  %433 = vmatpush1.msra.mxu0 %v36
  %434 = vmatprep.subr.mxu0 0.0
  %435 = vmatpush1.msra.mxu0 %v37
  %436 = vmatprep.subr.mxu0 0.0
  %437 = vmatpush1.msra.mxu0 %v38
  %438 = vmatprep.subr.mxu0 0.0
  %439 = vmatpush1.msra.mxu0 0.0
  %440 = vmatprep.subr.mxu0 0.0
  %441 = vmatpush1.msra.mxu0 0.0
  %442 = vmatprep.subr.mxu0 0.0
  %443 = vmatpush1.msra.mxu0 0.0
  %444 = vmatprep.subr.mxu0 0.0
  %445 = vmatpush1.msra.mxu0 0.0
  %446 = vmatprep.subr.mxu0 0.0
  %447 = vmatpush1.msra.mxu0 0.0
  %448 = vmatprep.subr.mxu0 0.0
  %449 = vmatpush1.msra.mxu0 0.0
  %450 = vmatprep.subr.mxu0 0.0
  %451 = vmatpush1.msra.mxu0 0.0
  %452 = vmatprep.subr.mxu0 0.0
  %453 = vmatpush1.msra.mxu0 0.0
  %454 = vmatprep.subr.mxu0 0.0
  %455 = vmatpush1.msra.mxu0 0.0
  %456 = vmatprep.subr.mxu0 0.0
  %457 = vmatpush1.msra.mxu0 0.0
  %458 = vmatprep.subr.mxu0 0.0
  %459 = vmatpush1.msra.mxu0 0.0
  %460 = vmatprep.subr.mxu0 0.0
  %461 = vmatpush1.msra.mxu0 0.0
  %462 = vmatprep.subr.mxu0 0.0
  %463 = vmatpush1.msra.mxu0 0.0
  %464 = vmatprep.subr.mxu0 0.0
  %465 = vmatpush1.msra.mxu0 0.0
  %466 = vmatprep.subr.mxu0 0.0
  %467 = vmatpush1.msra.mxu0 0.0
  %468 = vmatprep.subr.mxu0 0.0
  %469 = vmatpush1.msra.mxu0 0.0
  %470 = vmatprep.subr.mxu0 0.0
  %471 = vmatpush1.msra.mxu0 0.0
  %472 = vmatprep.subr.mxu0 0.0
  %473 = vmatpush1.msra.mxu0 0.0
  %474 = vmatprep.subr.mxu0 0.0
  %475 = vmatpush1.msra.mxu0 0.0
  %476 = vmatprep.subr.mxu0 0.0
  %477 = vmatpush1.msra.mxu0 0.0
  %478 = vmatprep.subr.mxu0 0.0
  %479 = vmatpush1.msra.mxu0 0.0
  %480 = vmatprep.subr.mxu0 0.0
  %481 = vmatpush1.msra.mxu0 0.0
  %482 = vmatprep.subr.mxu0 0.0
  %483 = vmatpush1.msra.mxu0 0.0
  %484 = vmatprep.subr.mxu0 0.0
  %485 = vmatpush1.msra.mxu0 0.0
  %486 = vmatprep.subr.mxu0 0.0
  %487 = vmatpush1.msra.mxu0 0.0
  %488 = vmatprep.subr.mxu0 0.0
  %489 = vmatpush1.msra.mxu0 0.0
  %490 = vmatprep.subr.mxu0 0.0
  %491 = vmatpush1.msra.mxu0 0.0
  %492 = vmatprep.subr.mxu0 0.0
  %493 = vmatpush1.msra.mxu0 0.0
  %494 = vmatprep.mubr.f32.mxu0 0.0
  %495 = vmatmul.mubr.f32.gmra.mrb[0].mxu0 %v428
  %v496 = vpop.f32.mrb[0].mxu0
  %v497 = vadd.f32 0.0, %v496
  %v498 = vpop.f32.mrb[0].mxu0
  %499 = vdwg.mxu0
  %v500 = vadd.f32 %v426, %v497
  %v501 = vtanh.pop %v500
  %s502 = scalar_lea.vmem [#allocation2], 32
  %v503 = vld [vmem:[%s502] sm:$0xff]
  %v505 = vsel %vm195, %v501, 0
  %507 = vmatprep.subr.mxu0 0.0
  %508 = vmatpush1.msra.mxu0 %v35
  %509 = vmatprep.subr.mxu0 0.0
  %510 = vmatpush1.msra.mxu0 %v36
  %511 = vmatprep.subr.mxu0 0.0
  %512 = vmatpush1.msra.mxu0 %v37
  %513 = vmatprep.subr.mxu0 0.0
  %514 = vmatpush1.msra.mxu0 %v38
  %515 = vmatprep.subr.mxu0 0.0
  %516 = vmatpush1.msra.mxu0 0.0
  %517 = vmatprep.subr.mxu0 0.0
  %518 = vmatpush1.msra.mxu0 0.0
  %519 = vmatprep.subr.mxu0 0.0
  %520 = vmatpush1.msra.mxu0 0.0
  %521 = vmatprep.subr.mxu0 0.0
  %522 = vmatpush1.msra.mxu0 0.0
  %523 = vmatprep.subr.mxu0 0.0
  %524 = vmatpush1.msra.mxu0 0.0
  %525 = vmatprep.subr.mxu0 0.0
  %526 = vmatpush1.msra.mxu0 0.0
  %527 = vmatprep.subr.mxu0 0.0
  %528 = vmatpush1.msra.mxu0 0.0
  %529 = vmatprep.subr.mxu0 0.0
  %530 = vmatpush1.msra.mxu0 0.0
  %531 = vmatprep.subr.mxu0 0.0
  %532 = vmatpush1.msra.mxu0 0.0
  %533 = vmatprep.subr.mxu0 0.0
  %534 = vmatpush1.msra.mxu0 0.0
  %535 = vmatprep.subr.mxu0 0.0
  %536 = vmatpush1.msra.mxu0 0.0
  %537 = vmatprep.subr.mxu0 0.0
  %538 = vmatpush1.msra.mxu0 0.0
  %539 = vmatprep.subr.mxu0 0.0
  %540 = vmatpush1.msra.mxu0 0.0
  %541 = vmatprep.subr.mxu0 0.0
  %542 = vmatpush1.msra.mxu0 0.0
  %543 = vmatprep.subr.mxu0 0.0
  %544 = vmatpush1.msra.mxu0 0.0
  %545 = vmatprep.subr.mxu0 0.0
  %546 = vmatpush1.msra.mxu0 0.0
  %547 = vmatprep.subr.mxu0 0.0
  %548 = vmatpush1.msra.mxu0 0.0
  %549 = vmatprep.subr.mxu0 0.0
  %550 = vmatpush1.msra.mxu0 0.0
  %551 = vmatprep.subr.mxu0 0.0
  %552 = vmatpush1.msra.mxu0 0.0
  %553 = vmatprep.subr.mxu0 0.0
  %554 = vmatpush1.msra.mxu0 0.0
  %555 = vmatprep.subr.mxu0 0.0
  %556 = vmatpush1.msra.mxu0 0.0
  %557 = vmatprep.subr.mxu0 0.0
  %558 = vmatpush1.msra.mxu0 0.0
  %559 = vmatprep.subr.mxu0 0.0
  %560 = vmatpush1.msra.mxu0 0.0
  %561 = vmatprep.subr.mxu0 0.0
  %562 = vmatpush1.msra.mxu0 0.0
  %563 = vmatprep.subr.mxu0 0.0
  %564 = vmatpush1.msra.mxu0 0.0
  %565 = vmatprep.subr.mxu0 0.0
  %566 = vmatpush1.msra.mxu0 0.0
  %567 = vmatprep.subr.mxu0 0.0
  %568 = vmatpush1.msra.mxu0 0.0
  %569 = vmatprep.subr.mxu0 0.0
  %570 = vmatpush1.msra.mxu0 0.0
  %571 = vmatprep.mubr.f32.mxu0 0.0
  %572 = vmatmul.mubr.f32.gmra.mrb[0].mxu0 %v505
  %v573 = vpop.f32.mrb[0].mxu0
  %v574 = vadd.f32 0.0, %v573
  %v575 = vpop.f32.mrb[0].mxu0
  %576 = vdwg.mxu0
  %v577 = vadd.f32 %v503, %v574
  %v578 = vtanh.pop %v577
  %s579 = scalar_lea.vmem [#allocation2], 40
  %v580 = vld [vmem:[%s579] sm:$0xff]
  %v582 = vsel %vm195, %v578, 0
  %584 = vmatprep.subr.mxu0 0.0
  %585 = vmatpush1.msra.mxu0 %v35
  %586 = vmatprep.subr.mxu0 0.0
  %587 = vmatpush1.msra.mxu0 %v36
  %588 = vmatprep.subr.mxu0 0.0
  %589 = vmatpush1.msra.mxu0 %v37
  %590 = vmatprep.subr.mxu0 0.0
  %591 = vmatpush1.msra.mxu0 %v38
  %592 = vmatprep.subr.mxu0 0.0
  %593 = vmatpush1.msra.mxu0 0.0
  %594 = vmatprep.subr.mxu0 0.0
  %595 = vmatpush1.msra.mxu0 0.0
  %596 = vmatprep.subr.mxu0 0.0
  %597 = vmatpush1.msra.mxu0 0.0
  %598 = vmatprep.subr.mxu0 0.0
  %599 = vmatpush1.msra.mxu0 0.0
  %600 = vmatprep.subr.mxu0 0.0
  %601 = vmatpush1.msra.mxu0 0.0
  %602 = vmatprep.subr.mxu0 0.0
  %603 = vmatpush1.msra.mxu0 0.0
  %604 = vmatprep.subr.mxu0 0.0
  %605 = vmatpush1.msra.mxu0 0.0
  %606 = vmatprep.subr.mxu0 0.0
  %607 = vmatpush1.msra.mxu0 0.0
  %608 = vmatprep.subr.mxu0 0.0
  %609 = vmatpush1.msra.mxu0 0.0
  %610 = vmatprep.subr.mxu0 0.0
  %611 = vmatpush1.msra.mxu0 0.0
  %612 = vmatprep.subr.mxu0 0.0
  %613 = vmatpush1.msra.mxu0 0.0
  %614 = vmatprep.subr.mxu0 0.0
  %615 = vmatpush1.msra.mxu0 0.0
  %616 = vmatprep.subr.mxu0 0.0
  %617 = vmatpush1.msra.mxu0 0.0
  %618 = vmatprep.subr.mxu0 0.0
  %619 = vmatpush1.msra.mxu0 0.0
  %620 = vmatprep.subr.mxu0 0.0
  %621 = vmatpush1.msra.mxu0 0.0
  %622 = vmatprep.subr.mxu0 0.0
  %623 = vmatpush1.msra.mxu0 0.0
  %624 = vmatprep.subr.mxu0 0.0
  %625 = vmatpush1.msra.mxu0 0.0
  %626 = vmatprep.subr.mxu0 0.0
  %627 = vmatpush1.msra.mxu0 0.0
  %628 = vmatprep.subr.mxu0 0.0
  %629 = vmatpush1.msra.mxu0 0.0
  %630 = vmatprep.subr.mxu0 0.0
  %631 = vmatpush1.msra.mxu0 0.0
  %632 = vmatprep.subr.mxu0 0.0
  %633 = vmatpush1.msra.mxu0 0.0
  %634 = vmatprep.subr.mxu0 0.0
  %635 = vmatpush1.msra.mxu0 0.0
  %636 = vmatprep.subr.mxu0 0.0
  %637 = vmatpush1.msra.mxu0 0.0
  %638 = vmatprep.subr.mxu0 0.0
  %639 = vmatpush1.msra.mxu0 0.0
  %640 = vmatprep.subr.mxu0 0.0
  %641 = vmatpush1.msra.mxu0 0.0
  %642 = vmatprep.subr.mxu0 0.0
  %643 = vmatpush1.msra.mxu0 0.0
  %644 = vmatprep.subr.mxu0 0.0
  %645 = vmatpush1.msra.mxu0 0.0
  %646 = vmatprep.subr.mxu0 0.0
  %647 = vmatpush1.msra.mxu0 0.0
  %648 = vmatprep.mubr.f32.mxu0 0.0
  %649 = vmatmul.mubr.f32.gmra.mrb[0].mxu0 %v582
  %v650 = vpop.f32.mrb[0].mxu0
  %v651 = vadd.f32 0.0, %v650
  %v652 = vpop.f32.mrb[0].mxu0
  %653 = vdwg.mxu0
  %v654 = vadd.f32 %v580, %v651
  %v655 = vtanh.pop %v654
  %s656 = scalar_lea.vmem [#allocation2], 48
  %v657 = vld [vmem:[%s656] sm:$0xff]
  %v659 = vsel %vm195, %v655, 0
  %661 = vmatprep.subr.mxu0 0.0
  %662 = vmatpush1.msra.mxu0 %v35
  %663 = vmatprep.subr.mxu0 0.0
  %664 = vmatpush1.msra.mxu0 %v36
  %665 = vmatprep.subr.mxu0 0.0
  %666 = vmatpush1.msra.mxu0 %v37
  %667 = vmatprep.subr.mxu0 0.0
  %668 = vmatpush1.msra.mxu0 %v38
  %669 = vmatprep.subr.mxu0 0.0
  %670 = vmatpush1.msra.mxu0 0.0
  %671 = vmatprep.subr.mxu0 0.0
  %672 = vmatpush1.msra.mxu0 0.0
  %673 = vmatprep.subr.mxu0 0.0
  %674 = vmatpush1.msra.mxu0 0.0
  %675 = vmatprep.subr.mxu0 0.0
  %676 = vmatpush1.msra.mxu0 0.0
  %677 = vmatprep.subr.mxu0 0.0
  %678 = vmatpush1.msra.mxu0 0.0
  %679 = vmatprep.subr.mxu0 0.0
  %680 = vmatpush1.msra.mxu0 0.0
  %681 = vmatprep.subr.mxu0 0.0
  %682 = vmatpush1.msra.mxu0 0.0
  %683 = vmatprep.subr.mxu0 0.0
  %684 = vmatpush1.msra.mxu0 0.0
  %685 = vmatprep.subr.mxu0 0.0
  %686 = vmatpush1.msra.mxu0 0.0
  %687 = vmatprep.subr.mxu0 0.0
  %688 = vmatpush1.msra.mxu0 0.0
  %689 = vmatprep.subr.mxu0 0.0
  %690 = vmatpush1.msra.mxu0 0.0
  %691 = vmatprep.subr.mxu0 0.0
  %692 = vmatpush1.msra.mxu0 0.0
  %693 = vmatprep.subr.mxu0 0.0
  %694 = vmatpush1.msra.mxu0 0.0
  %695 = vmatprep.subr.mxu0 0.0
  %696 = vmatpush1.msra.mxu0 0.0
  %697 = vmatprep.subr.mxu0 0.0
  %698 = vmatpush1.msra.mxu0 0.0
  %699 = vmatprep.subr.mxu0 0.0
  %700 = vmatpush1.msra.mxu0 0.0
  %701 = vmatprep.subr.mxu0 0.0
  %702 = vmatpush1.msra.mxu0 0.0
  %703 = vmatprep.subr.mxu0 0.0
  %704 = vmatpush1.msra.mxu0 0.0
  %705 = vmatprep.subr.mxu0 0.0
  %706 = vmatpush1.msra.mxu0 0.0
  %707 = vmatprep.subr.mxu0 0.0
  %708 = vmatpush1.msra.mxu0 0.0
  %709 = vmatprep.subr.mxu0 0.0
  %710 = vmatpush1.msra.mxu0 0.0
  %711 = vmatprep.subr.mxu0 0.0
  %712 = vmatpush1.msra.mxu0 0.0
  %713 = vmatprep.subr.mxu0 0.0
  %714 = vmatpush1.msra.mxu0 0.0
  %715 = vmatprep.subr.mxu0 0.0
  %716 = vmatpush1.msra.mxu0 0.0
  %717 = vmatprep.subr.mxu0 0.0
  %718 = vmatpush1.msra.mxu0 0.0
  %719 = vmatprep.subr.mxu0 0.0
  %720 = vmatpush1.msra.mxu0 0.0
  %721 = vmatprep.subr.mxu0 0.0
  %722 = vmatpush1.msra.mxu0 0.0
  %723 = vmatprep.subr.mxu0 0.0
  %724 = vmatpush1.msra.mxu0 0.0
  %725 = vmatprep.mubr.f32.mxu0 0.0
  %726 = vmatmul.mubr.f32.gmra.mrb[0].mxu0 %v659
  %v727 = vpop.f32.mrb[0].mxu0
  %v728 = vadd.f32 0.0, %v727
  %v729 = vpop.f32.mrb[0].mxu0
  %730 = vdwg.mxu0
  %v731 = vadd.f32 %v657, %v728
  %v732 = vtanh.pop %v731
  %s733 = scalar_lea.vmem [#allocation2], 56
  %v734 = vld [vmem:[%s733] sm:$0xff]
  %v736 = vsel %vm195, %v732, 0
  %738 = vmatprep.subr.mxu0 0.0
  %739 = vmatpush1.msra.mxu0 %v35
  %740 = vmatprep.subr.mxu0 0.0
  %741 = vmatpush1.msra.mxu0 %v36
  %742 = vmatprep.subr.mxu0 0.0
  %743 = vmatpush1.msra.mxu0 %v37
  %744 = vmatprep.subr.mxu0 0.0
  %745 = vmatpush1.msra.mxu0 %v38
  %746 = vmatprep.subr.mxu0 0.0
  %747 = vmatpush1.msra.mxu0 0.0
  %748 = vmatprep.subr.mxu0 0.0
  %749 = vmatpush1.msra.mxu0 0.0
  %750 = vmatprep.subr.mxu0 0.0
  %751 = vmatpush1.msra.mxu0 0.0
  %752 = vmatprep.subr.mxu0 0.0
  %753 = vmatpush1.msra.mxu0 0.0
  %754 = vmatprep.subr.mxu0 0.0
  %755 = vmatpush1.msra.mxu0 0.0
  %756 = vmatprep.subr.mxu0 0.0
  %757 = vmatpush1.msra.mxu0 0.0
  %758 = vmatprep.subr.mxu0 0.0
  %759 = vmatpush1.msra.mxu0 0.0
  %760 = vmatprep.subr.mxu0 0.0
  %761 = vmatpush1.msra.mxu0 0.0
  %762 = vmatprep.subr.mxu0 0.0
  %763 = vmatpush1.msra.mxu0 0.0
  %764 = vmatprep.subr.mxu0 0.0
  %765 = vmatpush1.msra.mxu0 0.0
  %766 = vmatprep.subr.mxu0 0.0
  %767 = vmatpush1.msra.mxu0 0.0
  %768 = vmatprep.subr.mxu0 0.0
  %769 = vmatpush1.msra.mxu0 0.0
  %770 = vmatprep.subr.mxu0 0.0
  %771 = vmatpush1.msra.mxu0 0.0
  %772 = vmatprep.subr.mxu0 0.0
  %773 = vmatpush1.msra.mxu0 0.0
  %774 = vmatprep.subr.mxu0 0.0
  %775 = vmatpush1.msra.mxu0 0.0
  %776 = vmatprep.subr.mxu0 0.0
  %777 = vmatpush1.msra.mxu0 0.0
  %778 = vmatprep.subr.mxu0 0.0
  %779 = vmatpush1.msra.mxu0 0.0
  %780 = vmatprep.subr.mxu0 0.0
  %781 = vmatpush1.msra.mxu0 0.0
  %782 = vmatprep.subr.mxu0 0.0
  %783 = vmatpush1.msra.mxu0 0.0
  %784 = vmatprep.subr.mxu0 0.0
  %785 = vmatpush1.msra.mxu0 0.0
  %786 = vmatprep.subr.mxu0 0.0
  %787 = vmatpush1.msra.mxu0 0.0
  %788 = vmatprep.subr.mxu0 0.0
  %789 = vmatpush1.msra.mxu0 0.0
  %790 = vmatprep.subr.mxu0 0.0
  %791 = vmatpush1.msra.mxu0 0.0
  %792 = vmatprep.subr.mxu0 0.0
  %793 = vmatpush1.msra.mxu0 0.0
  %794 = vmatprep.subr.mxu0 0.0
  %795 = vmatpush1.msra.mxu0 0.0
  %796 = vmatprep.subr.mxu0 0.0
  %797 = vmatpush1.msra.mxu0 0.0
  %798 = vmatprep.subr.mxu0 0.0
  %799 = vmatpush1.msra.mxu0 0.0
  %800 = vmatprep.subr.mxu0 0.0
  %801 = vmatpush1.msra.mxu0 0.0
  %802 = vmatprep.mubr.f32.mxu0 0.0
  %803 = vmatmul.mubr.f32.gmra.mrb[0].mxu0 %v736
  %v804 = vpop.f32.mrb[0].mxu0
  %v805 = vadd.f32 0.0, %v804
  %v806 = vpop.f32.mrb[0].mxu0
  %807 = vdwg.mxu0
  %v808 = vadd.f32 %v734, %v805
  %v809 = vtanh.pop %v808
  %v811 = vsel %vm195, %v809, 0
  %813 = vmatprep.subr.mxu0 0.0
  %814 = vmatpush1.msra.mxu0 %v39
  %815 = vmatprep.subr.mxu0 0.0
  %816 = vmatpush1.msra.mxu0 %v40
  %817 = vmatprep.subr.mxu0 0.0
  %818 = vmatpush1.msra.mxu0 %v41
  %819 = vmatprep.subr.mxu0 0.0
  %820 = vmatpush1.msra.mxu0 %v42
  %821 = vmatprep.subr.mxu0 0.0
  %822 = vmatpush1.msra.mxu0 0.0
  %823 = vmatprep.subr.mxu0 0.0
  %824 = vmatpush1.msra.mxu0 0.0
  %825 = vmatprep.subr.mxu0 0.0
  %826 = vmatpush1.msra.mxu0 0.0
  %827 = vmatprep.subr.mxu0 0.0
  %828 = vmatpush1.msra.mxu0 0.0
  %829 = vmatprep.subr.mxu0 0.0
  %830 = vmatpush1.msra.mxu0 0.0
  %831 = vmatprep.subr.mxu0 0.0
  %832 = vmatpush1.msra.mxu0 0.0
  %833 = vmatprep.subr.mxu0 0.0
  %834 = vmatpush1.msra.mxu0 0.0
  %835 = vmatprep.subr.mxu0 0.0
  %836 = vmatpush1.msra.mxu0 0.0
  %837 = vmatprep.subr.mxu0 0.0
  %838 = vmatpush1.msra.mxu0 0.0
  %839 = vmatprep.subr.mxu0 0.0
  %840 = vmatpush1.msra.mxu0 0.0
  %841 = vmatprep.subr.mxu0 0.0
  %842 = vmatpush1.msra.mxu0 0.0
  %843 = vmatprep.subr.mxu0 0.0
  %844 = vmatpush1.msra.mxu0 0.0
  %845 = vmatprep.subr.mxu0 0.0
  %846 = vmatpush1.msra.mxu0 0.0
  %847 = vmatprep.subr.mxu0 0.0
  %848 = vmatpush1.msra.mxu0 0.0
  %849 = vmatprep.subr.mxu0 0.0
  %850 = vmatpush1.msra.mxu0 0.0
  %851 = vmatprep.subr.mxu0 0.0
  %852 = vmatpush1.msra.mxu0 0.0
  %853 = vmatprep.subr.mxu0 0.0
  %854 = vmatpush1.msra.mxu0 0.0
  %855 = vmatprep.subr.mxu0 0.0
  %856 = vmatpush1.msra.mxu0 0.0
  %857 = vmatprep.subr.mxu0 0.0
  %858 = vmatpush1.msra.mxu0 0.0
  %859 = vmatprep.subr.mxu0 0.0
  %860 = vmatpush1.msra.mxu0 0.0
  %861 = vmatprep.subr.mxu0 0.0
  %862 = vmatpush1.msra.mxu0 0.0
  %863 = vmatprep.subr.mxu0 0.0
  %864 = vmatpush1.msra.mxu0 0.0
  %865 = vmatprep.subr.mxu0 0.0
  %866 = vmatpush1.msra.mxu0 0.0
  %867 = vmatprep.subr.mxu0 0.0
  %868 = vmatpush1.msra.mxu0 0.0
  %869 = vmatprep.subr.mxu0 0.0
  %870 = vmatpush1.msra.mxu0 0.0
  %871 = vmatprep.subr.mxu0 0.0
  %872 = vmatpush1.msra.mxu0 0.0
  %873 = vmatprep.subr.mxu0 0.0
  %874 = vmatpush1.msra.mxu0 0.0
  %875 = vmatprep.subr.mxu0 0.0
  %876 = vmatpush1.msra.mxu0 0.0
  %877 = vmatprep.mubr.f32.mxu0 0.0
  %878 = vmatmul.mubr.f32.gmra.mrb[0].mxu0 %v811
  %v879 = vpop.f32.mrb[0].mxu0
  %v880 = vadd.f32 0.0, %v879
  %v881 = vpop.f32.mrb[0].mxu0
  %882 = vdwg.mxu0
  %884 = vrot.lane.b32.xlu0 %v880, 32
  %v885 = vpop.permute.xlu0 %884
  %v887 = vadd.f32 %v194, %v885
  %v888 = vtanh.pop %v887
  %vm889 = vcmask 523520
  %890 = vst.msk [vmem:[#allocation2] sm:$0xff] %vm889, %v888
  %v891 = vld [vmem:[%s271] sm:$0xff]
  %893 = vrot.lane.b32.xlu0 %v888, 96
  %v894 = vpop.permute.xlu0 %893
  %v895 = vsel %vm195, %v894, 0
  %897 = vmatprep.subr.mxu0 0.0
  %898 = vmatpush1.msra.mxu0 %v39
  %899 = vmatprep.subr.mxu0 0.0
  %900 = vmatpush1.msra.mxu0 %v40
  %901 = vmatprep.subr.mxu0 0.0
  %902 = vmatpush1.msra.mxu0 %v41
  %903 = vmatprep.subr.mxu0 0.0
  %904 = vmatpush1.msra.mxu0 %v42
  %905 = vmatprep.subr.mxu0 0.0
  %906 = vmatpush1.msra.mxu0 0.0
  %907 = vmatprep.subr.mxu0 0.0
  %908 = vmatpush1.msra.mxu0 0.0
  %909 = vmatprep.subr.mxu0 0.0
  %910 = vmatpush1.msra.mxu0 0.0
  %911 = vmatprep.subr.mxu0 0.0
  %912 = vmatpush1.msra.mxu0 0.0
  %913 = vmatprep.subr.mxu0 0.0
  %914 = vmatpush1.msra.mxu0 0.0
  %915 = vmatprep.subr.mxu0 0.0
  %916 = vmatpush1.msra.mxu0 0.0
  %917 = vmatprep.subr.mxu0 0.0
  %918 = vmatpush1.msra.mxu0 0.0
  %919 = vmatprep.subr.mxu0 0.0
  %920 = vmatpush1.msra.mxu0 0.0
  %921 = vmatprep.subr.mxu0 0.0
  %922 = vmatpush1.msra.mxu0 0.0
  %923 = vmatprep.subr.mxu0 0.0
  %924 = vmatpush1.msra.mxu0 0.0
  %925 = vmatprep.subr.mxu0 0.0
  %926 = vmatpush1.msra.mxu0 0.0
  %927 = vmatprep.subr.mxu0 0.0
  %928 = vmatpush1.msra.mxu0 0.0
  %929 = vmatprep.subr.mxu0 0.0
  %930 = vmatpush1.msra.mxu0 0.0
  %931 = vmatprep.subr.mxu0 0.0
  %932 = vmatpush1.msra.mxu0 0.0
  %933 = vmatprep.subr.mxu0 0.0
  %934 = vmatpush1.msra.mxu0 0.0
  %935 = vmatprep.subr.mxu0 0.0
  %936 = vmatpush1.msra.mxu0 0.0
  %937 = vmatprep.subr.mxu0 0.0
  %938 = vmatpush1.msra.mxu0 0.0
  %939 = vmatprep.subr.mxu0 0.0
  %940 = vmatpush1.msra.mxu0 0.0
  %941 = vmatprep.subr.mxu0 0.0
  %942 = vmatpush1.msra.mxu0 0.0
  %943 = vmatprep.subr.mxu0 0.0
  %944 = vmatpush1.msra.mxu0 0.0
  %945 = vmatprep.subr.mxu0 0.0
  %946 = vmatpush1.msra.mxu0 0.0
  %947 = vmatprep.subr.mxu0 0.0
  %948 = vmatpush1.msra.mxu0 0.0
  %949 = vmatprep.subr.mxu0 0.0
  %950 = vmatpush1.msra.mxu0 0.0
  %951 = vmatprep.subr.mxu0 0.0
  %952 = vmatpush1.msra.mxu0 0.0
  %953 = vmatprep.subr.mxu0 0.0
  %954 = vmatpush1.msra.mxu0 0.0
  %955 = vmatprep.subr.mxu0 0.0
  %956 = vmatpush1.msra.mxu0 0.0
  %957 = vmatprep.subr.mxu0 0.0
  %958 = vmatpush1.msra.mxu0 0.0
  %959 = vmatprep.subr.mxu0 0.0
  %960 = vmatpush1.msra.mxu0 0.0
  %961 = vmatprep.mubr.f32.mxu0 0.0
  %962 = vmatmul.mubr.f32.gmra.mrb[0].mxu0 %v895
  %v963 = vpop.f32.mrb[0].mxu0
  %v964 = vadd.f32 0.0, %v963
  %v965 = vpop.f32.mrb[0].mxu0
  %966 = vdwg.mxu0
  %968 = vrot.lane.b32.xlu0 %v964, 32
  %v969 = vpop.permute.xlu0 %968
  %v971 = vadd.f32 %v891, %v969
  %v972 = vtanh.pop %v971
  %973 = vst.msk [vmem:[%s271] sm:$0xff] %vm889, %v972
  %v974 = vld [vmem:[%s348] sm:$0xff]
  %976 = vrot.lane.b32.xlu0 %v972, 96
  %v977 = vpop.permute.xlu0 %976
  %v978 = vsel %vm195, %v977, 0
  %980 = vmatprep.subr.mxu0 0.0
  %981 = vmatpush1.msra.mxu0 %v39
  %982 = vmatprep.subr.mxu0 0.0
  %983 = vmatpush1.msra.mxu0 %v40
  %984 = vmatprep.subr.mxu0 0.0
  %985 = vmatpush1.msra.mxu0 %v41
  %986 = vmatprep.subr.mxu0 0.0
  %987 = vmatpush1.msra.mxu0 %v42
  %988 = vmatprep.subr.mxu0 0.0
  %989 = vmatpush1.msra.mxu0 0.0
  %990 = vmatprep.subr.mxu0 0.0
  %991 = vmatpush1.msra.mxu0 0.0
  %992 = vmatprep.subr.mxu0 0.0
  %993 = vmatpush1.msra.mxu0 0.0
  %994 = vmatprep.subr.mxu0 0.0
  %995 = vmatpush1.msra.mxu0 0.0
  %996 = vmatprep.subr.mxu0 0.0
  %997 = vmatpush1.msra.mxu0 0.0
  %998 = vmatprep.subr.mxu0 0.0
  %999 = vmatpush1.msra.mxu0 0.0
  %1000 = vmatprep.subr.mxu0 0.0
  %1001 = vmatpush1.msra.mxu0 0.0
  %1002 = vmatprep.subr.mxu0 0.0
  %1003 = vmatpush1.msra.mxu0 0.0
  %1004 = vmatprep.subr.mxu0 0.0
  %1005 = vmatpush1.msra.mxu0 0.0
  %1006 = vmatprep.subr.mxu0 0.0
  %1007 = vmatpush1.msra.mxu0 0.0
  %1008 = vmatprep.subr.mxu0 0.0
  %1009 = vmatpush1.msra.mxu0 0.0
  %1010 = vmatprep.subr.mxu0 0.0
  %1011 = vmatpush1.msra.mxu0 0.0
  %1012 = vmatprep.subr.mxu0 0.0
  %1013 = vmatpush1.msra.mxu0 0.0
  %1014 = vmatprep.subr.mxu0 0.0
  %1015 = vmatpush1.msra.mxu0 0.0
  %1016 = vmatprep.subr.mxu0 0.0
  %1017 = vmatpush1.msra.mxu0 0.0
  %1018 = vmatprep.subr.mxu0 0.0
  %1019 = vmatpush1.msra.mxu0 0.0
  %1020 = vmatprep.subr.mxu0 0.0
  %1021 = vmatpush1.msra.mxu0 0.0
  %1022 = vmatprep.subr.mxu0 0.0
  %1023 = vmatpush1.msra.mxu0 0.0
  %1024 = vmatprep.subr.mxu0 0.0
  %1025 = vmatpush1.msra.mxu0 0.0
  %1026 = vmatprep.subr.mxu0 0.0
  %1027 = vmatpush1.msra.mxu0 0.0
  %1028 = vmatprep.subr.mxu0 0.0
  %1029 = vmatpush1.msra.mxu0 0.0
  %1030 = vmatprep.subr.mxu0 0.0
  %1031 = vmatpush1.msra.mxu0 0.0
  %1032 = vmatprep.subr.mxu0 0.0
  %1033 = vmatpush1.msra.mxu0 0.0
  %1034 = vmatprep.subr.mxu0 0.0
  %1035 = vmatpush1.msra.mxu0 0.0
  %1036 = vmatprep.subr.mxu0 0.0
  %1037 = vmatpush1.msra.mxu0 0.0
  %1038 = vmatprep.subr.mxu0 0.0
  %1039 = vmatpush1.msra.mxu0 0.0
  %1040 = vmatprep.subr.mxu0 0.0
  %1041 = vmatpush1.msra.mxu0 0.0
  %1042 = vmatprep.subr.mxu0 0.0
  %1043 = vmatpush1.msra.mxu0 0.0
  %1044 = vmatprep.mubr.f32.mxu0 0.0
  %1045 = vmatmul.mubr.f32.gmra.mrb[0].mxu0 %v978
  %v1046 = vpop.f32.mrb[0].mxu0
  %v1047 = vadd.f32 0.0, %v1046
  %v1048 = vpop.f32.mrb[0].mxu0
  %1049 = vdwg.mxu0
  %1051 = vrot.lane.b32.xlu0 %v1047, 32
  %v1052 = vpop.permute.xlu0 %1051
  %v1054 = vadd.f32 %v974, %v1052
  %v1055 = vtanh.pop %v1054
  %1056 = vst.msk [vmem:[%s348] sm:$0xff] %vm889, %v1055
  %v1057 = vld [vmem:[%s425] sm:$0xff]
  %1059 = vrot.lane.b32.xlu0 %v1055, 96
  %v1060 = vpop.permute.xlu0 %1059
  %v1061 = vsel %vm195, %v1060, 0
  %1063 = vmatprep.subr.mxu0 0.0
  %1064 = vmatpush1.msra.mxu0 %v39
  %1065 = vmatprep.subr.mxu0 0.0
  %1066 = vmatpush1.msra.mxu0 %v40
  %1067 = vmatprep.subr.mxu0 0.0
  %1068 = vmatpush1.msra.mxu0 %v41
  %1069 = vmatprep.subr.mxu0 0.0
  %1070 = vmatpush1.msra.mxu0 %v42
  %1071 = vmatprep.subr.mxu0 0.0
  %1072 = vmatpush1.msra.mxu0 0.0
  %1073 = vmatprep.subr.mxu0 0.0
  %1074 = vmatpush1.msra.mxu0 0.0
  %1075 = vmatprep.subr.mxu0 0.0
  %1076 = vmatpush1.msra.mxu0 0.0
  %1077 = vmatprep.subr.mxu0 0.0
  %1078 = vmatpush1.msra.mxu0 0.0
  %1079 = vmatprep.subr.mxu0 0.0
  %1080 = vmatpush1.msra.mxu0 0.0
  %1081 = vmatprep.subr.mxu0 0.0
  %1082 = vmatpush1.msra.mxu0 0.0
  %1083 = vmatprep.subr.mxu0 0.0
  %1084 = vmatpush1.msra.mxu0 0.0
  %1085 = vmatprep.subr.mxu0 0.0
  %1086 = vmatpush1.msra.mxu0 0.0
  %1087 = vmatprep.subr.mxu0 0.0
  %1088 = vmatpush1.msra.mxu0 0.0
  %1089 = vmatprep.subr.mxu0 0.0
  %1090 = vmatpush1.msra.mxu0 0.0
  %1091 = vmatprep.subr.mxu0 0.0
  %1092 = vmatpush1.msra.mxu0 0.0
  %1093 = vmatprep.subr.mxu0 0.0
  %1094 = vmatpush1.msra.mxu0 0.0
  %1095 = vmatprep.subr.mxu0 0.0
  %1096 = vmatpush1.msra.mxu0 0.0
  %1097 = vmatprep.subr.mxu0 0.0
  %1098 = vmatpush1.msra.mxu0 0.0
  %1099 = vmatprep.subr.mxu0 0.0
  %1100 = vmatpush1.msra.mxu0 0.0
  %1101 = vmatprep.subr.mxu0 0.0
  %1102 = vmatpush1.msra.mxu0 0.0
  %1103 = vmatprep.subr.mxu0 0.0
  %1104 = vmatpush1.msra.mxu0 0.0
  %1105 = vmatprep.subr.mxu0 0.0
  %1106 = vmatpush1.msra.mxu0 0.0
  %1107 = vmatprep.subr.mxu0 0.0
  %1108 = vmatpush1.msra.mxu0 0.0
  %1109 = vmatprep.subr.mxu0 0.0
  %1110 = vmatpush1.msra.mxu0 0.0
  %1111 = vmatprep.subr.mxu0 0.0
  %1112 = vmatpush1.msra.mxu0 0.0
  %1113 = vmatprep.subr.mxu0 0.0
  %1114 = vmatpush1.msra.mxu0 0.0
  %1115 = vmatprep.subr.mxu0 0.0
  %1116 = vmatpush1.msra.mxu0 0.0
  %1117 = vmatprep.subr.mxu0 0.0
  %1118 = vmatpush1.msra.mxu0 0.0
  %1119 = vmatprep.subr.mxu0 0.0
  %1120 = vmatpush1.msra.mxu0 0.0
  %1121 = vmatprep.subr.mxu0 0.0
  %1122 = vmatpush1.msra.mxu0 0.0
  %1123 = vmatprep.subr.mxu0 0.0
  %1124 = vmatpush1.msra.mxu0 0.0
  %1125 = vmatprep.subr.mxu0 0.0
  %1126 = vmatpush1.msra.mxu0 0.0
  %1127 = vmatprep.mubr.f32.mxu0 0.0
  %1128 = vmatmul.mubr.f32.gmra.mrb[0].mxu0 %v1061
  %v1129 = vpop.f32.mrb[0].mxu0
  %v1130 = vadd.f32 0.0, %v1129
  %v1131 = vpop.f32.mrb[0].mxu0
  %1132 = vdwg.mxu0
  %1134 = vrot.lane.b32.xlu0 %v1130, 32
  %v1135 = vpop.permute.xlu0 %1134
  %v1137 = vadd.f32 %v1057, %v1135
  %v1138 = vtanh.pop %v1137
  %1139 = vst.msk [vmem:[%s425] sm:$0xff] %vm889, %v1138
  %v1140 = vld [vmem:[%s502] sm:$0xff]
  %1142 = vrot.lane.b32.xlu0 %v1138, 96
  %v1143 = vpop.permute.xlu0 %1142
  %v1144 = vsel %vm195, %v1143, 0
  %1146 = vmatprep.subr.mxu0 0.0
  %1147 = vmatpush1.msra.mxu0 %v39
  %1148 = vmatprep.subr.mxu0 0.0
  %1149 = vmatpush1.msra.mxu0 %v40
  %1150 = vmatprep.subr.mxu0 0.0
  %1151 = vmatpush1.msra.mxu0 %v41
  %1152 = vmatprep.subr.mxu0 0.0
  %1153 = vmatpush1.msra.mxu0 %v42
  %1154 = vmatprep.subr.mxu0 0.0
  %1155 = vmatpush1.msra.mxu0 0.0
  %1156 = vmatprep.subr.mxu0 0.0
  %1157 = vmatpush1.msra.mxu0 0.0
  %1158 = vmatprep.subr.mxu0 0.0
  %1159 = vmatpush1.msra.mxu0 0.0
  %1160 = vmatprep.subr.mxu0 0.0
  %1161 = vmatpush1.msra.mxu0 0.0
  %1162 = vmatprep.subr.mxu0 0.0
  %1163 = vmatpush1.msra.mxu0 0.0
  %1164 = vmatprep.subr.mxu0 0.0
  %1165 = vmatpush1.msra.mxu0 0.0
  %1166 = vmatprep.subr.mxu0 0.0
  %1167 = vmatpush1.msra.mxu0 0.0
  %1168 = vmatprep.subr.mxu0 0.0
  %1169 = vmatpush1.msra.mxu0 0.0
  %1170 = vmatprep.subr.mxu0 0.0
  %1171 = vmatpush1.msra.mxu0 0.0
  %1172 = vmatprep.subr.mxu0 0.0
  %1173 = vmatpush1.msra.mxu0 0.0
  %1174 = vmatprep.subr.mxu0 0.0
  %1175 = vmatpush1.msra.mxu0 0.0
  %1176 = vmatprep.subr.mxu0 0.0
  %1177 = vmatpush1.msra.mxu0 0.0
  %1178 = vmatprep.subr.mxu0 0.0
  %1179 = vmatpush1.msra.mxu0 0.0
  %1180 = vmatprep.subr.mxu0 0.0
  %1181 = vmatpush1.msra.mxu0 0.0
  %1182 = vmatprep.subr.mxu0 0.0
  %1183 = vmatpush1.msra.mxu0 0.0
  %1184 = vmatprep.subr.mxu0 0.0
  %1185 = vmatpush1.msra.mxu0 0.0
  %1186 = vmatprep.subr.mxu0 0.0
  %1187 = vmatpush1.msra.mxu0 0.0
  %1188 = vmatprep.subr.mxu0 0.0
  %1189 = vmatpush1.msra.mxu0 0.0
  %1190 = vmatprep.subr.mxu0 0.0
  %1191 = vmatpush1.msra.mxu0 0.0
  %1192 = vmatprep.subr.mxu0 0.0
  %1193 = vmatpush1.msra.mxu0 0.0
  %1194 = vmatprep.subr.mxu0 0.0
  %1195 = vmatpush1.msra.mxu0 0.0
  %1196 = vmatprep.subr.mxu0 0.0
  %1197 = vmatpush1.msra.mxu0 0.0
  %1198 = vmatprep.subr.mxu0 0.0
  %1199 = vmatpush1.msra.mxu0 0.0
  %1200 = vmatprep.subr.mxu0 0.0
  %1201 = vmatpush1.msra.mxu0 0.0
  %1202 = vmatprep.subr.mxu0 0.0
  %1203 = vmatpush1.msra.mxu0 0.0
  %1204 = vmatprep.subr.mxu0 0.0
  %1205 = vmatpush1.msra.mxu0 0.0
  %1206 = vmatprep.subr.mxu0 0.0
  %1207 = vmatpush1.msra.mxu0 0.0
  %1208 = vmatprep.subr.mxu0 0.0
  %1209 = vmatpush1.msra.mxu0 0.0
  %1210 = vmatprep.mubr.f32.mxu0 0.0
  %1211 = vmatmul.mubr.f32.gmra.mrb[0].mxu0 %v1144
  %v1212 = vpop.f32.mrb[0].mxu0
  %v1213 = vadd.f32 0.0, %v1212
  %v1214 = vpop.f32.mrb[0].mxu0
  %1215 = vdwg.mxu0
  %1217 = vrot.lane.b32.xlu0 %v1213, 32
  %v1218 = vpop.permute.xlu0 %1217
  %v1220 = vadd.f32 %v1140, %v1218
  %v1221 = vtanh.pop %v1220
  %1222 = vst.msk [vmem:[%s502] sm:$0xff] %vm889, %v1221
  %v1223 = vld [vmem:[%s579] sm:$0xff]
  %1225 = vrot.lane.b32.xlu0 %v1221, 96
  %v1226 = vpop.permute.xlu0 %1225
  %v1227 = vsel %vm195, %v1226, 0
  %1229 = vmatprep.subr.mxu0 0.0
  %1230 = vmatpush1.msra.mxu0 %v39
  %1231 = vmatprep.subr.mxu0 0.0
  %1232 = vmatpush1.msra.mxu0 %v40
  %1233 = vmatprep.subr.mxu0 0.0
  %1234 = vmatpush1.msra.mxu0 %v41
  %1235 = vmatprep.subr.mxu0 0.0
  %1236 = vmatpush1.msra.mxu0 %v42
  %1237 = vmatprep.subr.mxu0 0.0
  %1238 = vmatpush1.msra.mxu0 0.0
  %1239 = vmatprep.subr.mxu0 0.0
  %1240 = vmatpush1.msra.mxu0 0.0
  %1241 = vmatprep.subr.mxu0 0.0
  %1242 = vmatpush1.msra.mxu0 0.0
  %1243 = vmatprep.subr.mxu0 0.0
  %1244 = vmatpush1.msra.mxu0 0.0
  %1245 = vmatprep.subr.mxu0 0.0
  %1246 = vmatpush1.msra.mxu0 0.0
  %1247 = vmatprep.subr.mxu0 0.0
  %1248 = vmatpush1.msra.mxu0 0.0
  %1249 = vmatprep.subr.mxu0 0.0
  %1250 = vmatpush1.msra.mxu0 0.0
  %1251 = vmatprep.subr.mxu0 0.0
  %1252 = vmatpush1.msra.mxu0 0.0
  %1253 = vmatprep.subr.mxu0 0.0
  %1254 = vmatpush1.msra.mxu0 0.0
  %1255 = vmatprep.subr.mxu0 0.0
  %1256 = vmatpush1.msra.mxu0 0.0
  %1257 = vmatprep.subr.mxu0 0.0
  %1258 = vmatpush1.msra.mxu0 0.0
  %1259 = vmatprep.subr.mxu0 0.0
  %1260 = vmatpush1.msra.mxu0 0.0
  %1261 = vmatprep.subr.mxu0 0.0
  %1262 = vmatpush1.msra.mxu0 0.0
  %1263 = vmatprep.subr.mxu0 0.0
  %1264 = vmatpush1.msra.mxu0 0.0
  %1265 = vmatprep.subr.mxu0 0.0
  %1266 = vmatpush1.msra.mxu0 0.0
  %1267 = vmatprep.subr.mxu0 0.0
  %1268 = vmatpush1.msra.mxu0 0.0
  %1269 = vmatprep.subr.mxu0 0.0
  %1270 = vmatpush1.msra.mxu0 0.0
  %1271 = vmatprep.subr.mxu0 0.0
  %1272 = vmatpush1.msra.mxu0 0.0
  %1273 = vmatprep.subr.mxu0 0.0
  %1274 = vmatpush1.msra.mxu0 0.0
  %1275 = vmatprep.subr.mxu0 0.0
  %1276 = vmatpush1.msra.mxu0 0.0
  %1277 = vmatprep.subr.mxu0 0.0
  %1278 = vmatpush1.msra.mxu0 0.0
  %1279 = vmatprep.subr.mxu0 0.0
  %1280 = vmatpush1.msra.mxu0 0.0
  %1281 = vmatprep.subr.mxu0 0.0
  %1282 = vmatpush1.msra.mxu0 0.0
  %1283 = vmatprep.subr.mxu0 0.0
  %1284 = vmatpush1.msra.mxu0 0.0
  %1285 = vmatprep.subr.mxu0 0.0
  %1286 = vmatpush1.msra.mxu0 0.0
  %1287 = vmatprep.subr.mxu0 0.0
  %1288 = vmatpush1.msra.mxu0 0.0
  %1289 = vmatprep.subr.mxu0 0.0
  %1290 = vmatpush1.msra.mxu0 0.0
  %1291 = vmatprep.subr.mxu0 0.0
  %1292 = vmatpush1.msra.mxu0 0.0
  %1293 = vmatprep.mubr.f32.mxu0 0.0
  %1294 = vmatmul.mubr.f32.gmra.mrb[0].mxu0 %v1227
  %v1295 = vpop.f32.mrb[0].mxu0
  %v1296 = vadd.f32 0.0, %v1295
  %v1297 = vpop.f32.mrb[0].mxu0
  %1298 = vdwg.mxu0
  %1300 = vrot.lane.b32.xlu0 %v1296, 32
  %v1301 = vpop.permute.xlu0 %1300
  %v1303 = vadd.f32 %v1223, %v1301
  %v1304 = vtanh.pop %v1303
  %1305 = vst.msk [vmem:[%s579] sm:$0xff] %vm889, %v1304
  %v1306 = vld [vmem:[%s656] sm:$0xff]
  %1308 = vrot.lane.b32.xlu0 %v1304, 96
  %v1309 = vpop.permute.xlu0 %1308
  %v1310 = vsel %vm195, %v1309, 0
  %1312 = vmatprep.subr.mxu0 0.0
  %1313 = vmatpush1.msra.mxu0 %v39
  %1314 = vmatprep.subr.mxu0 0.0
  %1315 = vmatpush1.msra.mxu0 %v40
  %1316 = vmatprep.subr.mxu0 0.0
  %1317 = vmatpush1.msra.mxu0 %v41
  %1318 = vmatprep.subr.mxu0 0.0
  %1319 = vmatpush1.msra.mxu0 %v42
  %1320 = vmatprep.subr.mxu0 0.0
  %1321 = vmatpush1.msra.mxu0 0.0
  %1322 = vmatprep.subr.mxu0 0.0
  %1323 = vmatpush1.msra.mxu0 0.0
  %1324 = vmatprep.subr.mxu0 0.0
  %1325 = vmatpush1.msra.mxu0 0.0
  %1326 = vmatprep.subr.mxu0 0.0
  %1327 = vmatpush1.msra.mxu0 0.0
  %1328 = vmatprep.subr.mxu0 0.0
  %1329 = vmatpush1.msra.mxu0 0.0
  %1330 = vmatprep.subr.mxu0 0.0
  %1331 = vmatpush1.msra.mxu0 0.0
  %1332 = vmatprep.subr.mxu0 0.0
  %1333 = vmatpush1.msra.mxu0 0.0
  %1334 = vmatprep.subr.mxu0 0.0
  %1335 = vmatpush1.msra.mxu0 0.0
  %1336 = vmatprep.subr.mxu0 0.0
  %1337 = vmatpush1.msra.mxu0 0.0
  %1338 = vmatprep.subr.mxu0 0.0
  %1339 = vmatpush1.msra.mxu0 0.0
  %1340 = vmatprep.subr.mxu0 0.0
  %1341 = vmatpush1.msra.mxu0 0.0
  %1342 = vmatprep.subr.mxu0 0.0
  %1343 = vmatpush1.msra.mxu0 0.0
  %1344 = vmatprep.subr.mxu0 0.0
  %1345 = vmatpush1.msra.mxu0 0.0
  %1346 = vmatprep.subr.mxu0 0.0
  %1347 = vmatpush1.msra.mxu0 0.0
  %1348 = vmatprep.subr.mxu0 0.0
  %1349 = vmatpush1.msra.mxu0 0.0
  %1350 = vmatprep.subr.mxu0 0.0
  %1351 = vmatpush1.msra.mxu0 0.0
  %1352 = vmatprep.subr.mxu0 0.0
  %1353 = vmatpush1.msra.mxu0 0.0
  %1354 = vmatprep.subr.mxu0 0.0
  %1355 = vmatpush1.msra.mxu0 0.0
  %1356 = vmatprep.subr.mxu0 0.0
  %1357 = vmatpush1.msra.mxu0 0.0
  %1358 = vmatprep.subr.mxu0 0.0
  %1359 = vmatpush1.msra.mxu0 0.0
  %1360 = vmatprep.subr.mxu0 0.0
  %1361 = vmatpush1.msra.mxu0 0.0
  %1362 = vmatprep.subr.mxu0 0.0
  %1363 = vmatpush1.msra.mxu0 0.0
  %1364 = vmatprep.subr.mxu0 0.0
  %1365 = vmatpush1.msra.mxu0 0.0
  %1366 = vmatprep.subr.mxu0 0.0
  %1367 = vmatpush1.msra.mxu0 0.0
  %1368 = vmatprep.subr.mxu0 0.0
  %1369 = vmatpush1.msra.mxu0 0.0
  %1370 = vmatprep.subr.mxu0 0.0
  %1371 = vmatpush1.msra.mxu0 0.0
  %1372 = vmatprep.subr.mxu0 0.0
  %1373 = vmatpush1.msra.mxu0 0.0
  %1374 = vmatprep.subr.mxu0 0.0
  %1375 = vmatpush1.msra.mxu0 0.0
  %1376 = vmatprep.mubr.f32.mxu0 0.0
  %1377 = vmatmul.mubr.f32.gmra.mrb[0].mxu0 %v1310
  %v1378 = vpop.f32.mrb[0].mxu0
  %v1379 = vadd.f32 0.0, %v1378
  %v1380 = vpop.f32.mrb[0].mxu0
  %1381 = vdwg.mxu0
  %1383 = vrot.lane.b32.xlu0 %v1379, 32
  %v1384 = vpop.permute.xlu0 %1383
  %v1386 = vadd.f32 %v1306, %v1384
  %v1387 = vtanh.pop %v1386
  %1388 = vst.msk [vmem:[%s656] sm:$0xff] %vm889, %v1387
  %v1389 = vld [vmem:[%s733] sm:$0xff]
  %1391 = vrot.lane.b32.xlu0 %v1387, 96
  %v1392 = vpop.permute.xlu0 %1391
  %v1393 = vsel %vm195, %v1392, 0
  %1395 = vmatprep.subr.mxu0 0.0
  %1396 = vmatpush1.msra.mxu0 %v39
  %1397 = vmatprep.subr.mxu0 0.0
  %1398 = vmatpush1.msra.mxu0 %v40
  %1399 = vmatprep.subr.mxu0 0.0
  %1400 = vmatpush1.msra.mxu0 %v41
  %1401 = vmatprep.subr.mxu0 0.0
  %1402 = vmatpush1.msra.mxu0 %v42
  %1403 = vmatprep.subr.mxu0 0.0
  %1404 = vmatpush1.msra.mxu0 0.0
  %1405 = vmatprep.subr.mxu0 0.0
  %1406 = vmatpush1.msra.mxu0 0.0
  %1407 = vmatprep.subr.mxu0 0.0
  %1408 = vmatpush1.msra.mxu0 0.0
  %1409 = vmatprep.subr.mxu0 0.0
  %1410 = vmatpush1.msra.mxu0 0.0
  %1411 = vmatprep.subr.mxu0 0.0
  %1412 = vmatpush1.msra.mxu0 0.0
  %1413 = vmatprep.subr.mxu0 0.0
  %1414 = vmatpush1.msra.mxu0 0.0
  %1415 = vmatprep.subr.mxu0 0.0
  %1416 = vmatpush1.msra.mxu0 0.0
  %1417 = vmatprep.subr.mxu0 0.0
  %1418 = vmatpush1.msra.mxu0 0.0
  %1419 = vmatprep.subr.mxu0 0.0
  %1420 = vmatpush1.msra.mxu0 0.0
  %1421 = vmatprep.subr.mxu0 0.0
  %1422 = vmatpush1.msra.mxu0 0.0
  %1423 = vmatprep.subr.mxu0 0.0
  %1424 = vmatpush1.msra.mxu0 0.0
  %1425 = vmatprep.subr.mxu0 0.0
  %1426 = vmatpush1.msra.mxu0 0.0
  %1427 = vmatprep.subr.mxu0 0.0
  %1428 = vmatpush1.msra.mxu0 0.0
  %1429 = vmatprep.subr.mxu0 0.0
  %1430 = vmatpush1.msra.mxu0 0.0
  %1431 = vmatprep.subr.mxu0 0.0
  %1432 = vmatpush1.msra.mxu0 0.0
  %1433 = vmatprep.subr.mxu0 0.0
  %1434 = vmatpush1.msra.mxu0 0.0
  %1435 = vmatprep.subr.mxu0 0.0
  %1436 = vmatpush1.msra.mxu0 0.0
  %1437 = vmatprep.subr.mxu0 0.0
  %1438 = vmatpush1.msra.mxu0 0.0
  %1439 = vmatprep.subr.mxu0 0.0
  %1440 = vmatpush1.msra.mxu0 0.0
  %1441 = vmatprep.subr.mxu0 0.0
  %1442 = vmatpush1.msra.mxu0 0.0
  %1443 = vmatprep.subr.mxu0 0.0
  %1444 = vmatpush1.msra.mxu0 0.0
  %1445 = vmatprep.subr.mxu0 0.0
  %1446 = vmatpush1.msra.mxu0 0.0
  %1447 = vmatprep.subr.mxu0 0.0
  %1448 = vmatpush1.msra.mxu0 0.0
  %1449 = vmatprep.subr.mxu0 0.0
  %1450 = vmatpush1.msra.mxu0 0.0
  %1451 = vmatprep.subr.mxu0 0.0
  %1452 = vmatpush1.msra.mxu0 0.0
  %1453 = vmatprep.subr.mxu0 0.0
  %1454 = vmatpush1.msra.mxu0 0.0
  %1455 = vmatprep.subr.mxu0 0.0
  %1456 = vmatpush1.msra.mxu0 0.0
  %1457 = vmatprep.subr.mxu0 0.0
  %1458 = vmatpush1.msra.mxu0 0.0
  %1459 = vmatprep.mubr.f32.mxu0 0.0
  %1460 = vmatmul.mubr.f32.gmra.mrb[0].mxu0 %v1393
  %v1461 = vpop.f32.mrb[0].mxu0
  %v1462 = vadd.f32 0.0, %v1461
  %v1463 = vpop.f32.mrb[0].mxu0
  %1464 = vdwg.mxu0
  %1466 = vrot.lane.b32.xlu0 %v1462, 32
  %v1467 = vpop.permute.xlu0 %1466
  %v1469 = vadd.f32 %v1389, %v1467
  %v1470 = vtanh.pop %v1469
  %1471 = vst.msk [vmem:[%s733] sm:$0xff] %vm889, %v1470
  %v1472 = vld [vmem:[#allocation2] sm:$0xff]
  %v1473 = vld [vmem:[#allocation2 + $0x8] sm:$0xff]
  %v1474 = vld [vmem:[#allocation2 + $0x10] sm:$0xff]
  %v1475 = vld [vmem:[#allocation2 + $0x18] sm:$0xff]
  %v1476 = vld [vmem:[#allocation2 + $0x20] sm:$0xff]
  %v1477 = vld [vmem:[#allocation2 + $0x28] sm:$0xff]
  %v1478 = vld [vmem:[#allocation2 + $0x30] sm:$0xff]
  %v1479 = vld [vmem:[#allocation2 + $0x38] sm:$0xff]
  %v1480 = vld [vmem:[%s5] sm:$0x1]
  %v1482 = vlaneseq
  %v1483 = vshrl.u32 %v1482, 7
  %v1484 = vsub.s32 0, %v1483
  %v1485 = vrot.slane %v1480, %v1484
  %1486 = vrot.lane.b32.xlu0 %v1485, 32
  %v1487 = vpop.permute.xlu0 %1486
  %v1489 = vmul.f32 %v1472, %v1487
  %v1490 = vmul.f32 %v1473, %v1487
  %v1491 = vmul.f32 %v1474, %v1487
  %v1492 = vmul.f32 %v1475, %v1487
  %v1493 = vmul.f32 %v1476, %v1487
  %v1494 = vmul.f32 %v1477, %v1487
  %v1495 = vmul.f32 %v1478, %v1487
  %v1496 = vmul.f32 %v1479, %v1487
  %1505 = vrot.lane.b32.xlu0 %v1489, 96
  %v1506 = vpop.permute.xlu0 %1505
  %1507 = vrot.lane.b32.xlu0 %v1490, 96
  %v1508 = vpop.permute.xlu0 %1507
  %1509 = vrot.lane.b32.xlu0 %v1491, 96
  %v1510 = vpop.permute.xlu0 %1509
  %1511 = vrot.lane.b32.xlu0 %v1492, 96
  %v1512 = vpop.permute.xlu0 %1511
  %1513 = vrot.lane.b32.xlu0 %v1493, 96
  %v1514 = vpop.permute.xlu0 %1513
  %1515 = vrot.lane.b32.xlu0 %v1494, 96
  %v1516 = vpop.permute.xlu0 %1515
  %1517 = vrot.lane.b32.xlu0 %v1495, 96
  %v1518 = vpop.permute.xlu0 %1517
  %1519 = vrot.lane.b32.xlu0 %v1496, 96
  %v1520 = vpop.permute.xlu0 %1519
  %v1529 = vsel %vm195, %v1506, 0.0
  %1530 = vadd.xlane.f32.xlu0 %v1529
  %v1531 = vpop.xlane.xlu0 %1530
  %v1532 = vsel %vm195, %v1508, 0.0
  %1533 = vadd.xlane.f32.xlu0 %v1532
  %v1534 = vpop.xlane.xlu0 %1533
  %v1535 = vsel %vm195, %v1510, 0.0
  %1536 = vadd.xlane.f32.xlu0 %v1535
  %v1537 = vpop.xlane.xlu0 %1536
  %v1538 = vsel %vm195, %v1512, 0.0
  %1539 = vadd.xlane.f32.xlu0 %v1538
  %v1540 = vpop.xlane.xlu0 %1539
  %v1541 = vsel %vm195, %v1514, 0.0
  %1542 = vadd.xlane.f32.xlu0 %v1541
  %v1543 = vpop.xlane.xlu0 %1542
  %v1544 = vsel %vm195, %v1516, 0.0
  %1545 = vadd.xlane.f32.xlu0 %v1544
  %v1546 = vpop.xlane.xlu0 %1545
  %v1547 = vsel %vm195, %v1518, 0.0
  %1548 = vadd.xlane.f32.xlu0 %v1547
  %v1549 = vpop.xlane.xlu0 %1548
  %v1550 = vsel %vm195, %v1520, 0.0
  %1551 = vadd.xlane.f32.xlu0 %v1550
  %v1552 = vpop.xlane.xlu0 %1551
  %s1553 = sld [smem:[#allocation3]]
  %v1554 = vstv %s1553
  %v1555 = vadd.f32 %v1531, %v1554
  %v1556 = vadd.f32 %v1534, %v1554
  %v1557 = vadd.f32 %v1537, %v1554
  %v1558 = vadd.f32 %v1540, %v1554
  %v1559 = vadd.f32 %v1543, %v1554
  %v1560 = vadd.f32 %v1546, %v1554
  %v1561 = vadd.f32 %v1549, %v1554
  %v1562 = vadd.f32 %v1552, %v1554
  %vm1563 = vcmask 7168
  %1564 = vst.msk [vmem:[%s7] sm:$0xff] %vm1563, %v1555
  %1565 = vst.msk [vmem:[%s7 + $0x8] sm:$0xff] %vm1563, %v1556
  %1566 = vst.msk [vmem:[%s7 + $0x10] sm:$0xff] %vm1563, %v1557
  %1567 = vst.msk [vmem:[%s7 + $0x18] sm:$0xff] %vm1563, %v1558
  %1568 = vst.msk [vmem:[%s7 + $0x20] sm:$0xff] %vm1563, %v1559
  %1569 = vst.msk [vmem:[%s7 + $0x28] sm:$0xff] %vm1563, %v1560
  %1570 = vst.msk [vmem:[%s7 + $0x30] sm:$0xff] %vm1563, %v1561
  %1571 = vst.msk [vmem:[%s7 + $0x38] sm:$0xff] %vm1563, %v1562
  // Predicated region
  $region30: #{tpu_custom_call.1} parent=0 // pred_check
    _
  $region31: #{tpu_custom_call.1} parent=0 // pred_check_branch
    %1573 = sbr.rel (0) target = $region33
  $region32: #{tpu_custom_call.1} parent=0 // pred_region
    _
  $region33: #{tpu_custom_call.1} parent=0 // pred_fallthru
    _
  // Predicated region
  $region34: #{tpu_custom_call.1} parent=0 // pred_check
    _
  $region35: #{tpu_custom_call.1} parent=0 // pred_check_branch
    %1575 = sbr.rel (0) target = $region37
  $region36: #{tpu_custom_call.1} parent=0 // pred_region
    _
  $region37: #{tpu_custom_call.1} parent=0 // pred_fallthru
    _

</llo_original>
